<compile_context>
chip_gen: v5e
topology: v5e:2x2
jax: 0.10.0
libtpu: 0.0.40
codegen_flags: <defaults>
</compile_context>

<pallas_src>
import jax
import jax.numpy as jnp
from jax.experimental import pallas as pl
from jax.experimental.pallas import tpu as pltpu

EPS = 1e-3  # BatchNorm2d(eps=0.001)


def conv_bn_relu_kernel(patch_ref, w_ref, gb_ref, out_ref):
    # patch_ref : [M, K]      bf16 im2col slab (M = H*W, K = 3*Cin)
    # w_ref     : [K, Cout]   bf16
    # gb_ref    : [2, Cout]   f32   (row 0 = gamma, row 1 = beta)
    # out_ref   : [M, Cout]   f32   (lane-dense: Cout = 384 = 3*128)
    acc = jnp.dot(patch_ref[...], w_ref[...], preferred_element_type=jnp.float32)

    gb = gb_ref[...]
    gamma = gb[0:1, :]                                    # [1, Cout]
    beta = gb[1:2, :]                                     # [1, Cout]

    # BatchNorm2d training-mode forward: per-channel batch stats over N*H*W (= M
    # rows), biased variance, all in f32.
    m = acc.shape[0]
    inv_m = 1.0 / m
    mean = jnp.sum(acc, axis=0, keepdims=True) * inv_m    # [1, Cout]
    centered = acc - mean
    var = jnp.sum(centered * centered, axis=0, keepdims=True) * inv_m
    scale = jax.lax.rsqrt(var + EPS) * gamma              # EUP rsqrt

    # affine + ReLU
    out_ref[...] = jnp.maximum(centered * scale + beta, 0.0)


def conv_bn_relu(x_nchw, weight_oihw, gamma, beta):
    """x_nchw: [1, Cin, H, W]; weight_oihw: [Cout, Cin, 1, 3]; gamma/beta: [Cout]."""
    N, Cin, H, W = x_nchw.shape
    assert N == 1, "kernel written for batch 1 (matches the reference module input)"
    Cout, _, KH, KW = weight_oihw.shape
    assert KH == 1 and KW == 3

    # ---- layout glue (XLA fuses pad/slice/concat/cast after the transpose) ----
    x_hwc = jnp.transpose(x_nchw, (0, 2, 3, 1)).reshape(H, W, Cin)      # [H, W, Cin]
    x_pad = jnp.pad(x_hwc, ((0, 0), (1, 1), (0, 0)))                    # [H, W+2, Cin]
    # im2col: column block kw*Cin + c  <->  x_pad[h, w+kw, c]
    patch = jnp.concatenate([x_pad[:, kw:kw + W, :] for kw in range(KW)], axis=-1)
    patch = patch.reshape(H * W, KW * Cin).astype(jnp.bfloat16)         # [25, 1152]

    # weight [Cout, Cin, 1, KW] -> [KW*Cin, Cout], matching the patch column order
    w2 = jnp.transpose(weight_oihw[:, :, 0, :], (2, 1, 0)).reshape(KW * Cin, Cout)
    w2 = w2.astype(jnp.bfloat16)                                        # [1152, 384]

    # gamma / beta packed into one small f32 operand -> single DMA
    gb = jnp.stack([gamma, beta], axis=0).astype(jnp.float32)           # [2, 384]

    flops = 2 * (H * W) * (KW * Cin) * Cout
    bytes_accessed = (patch.size * 2 + w2.size * 2
                      + gb.size * 4 + (H * W) * Cout * 4)

    vmem = pl.BlockSpec(memory_space=pltpu.MemorySpace.VMEM)
    out_flat = pl.pallas_call(
        conv_bn_relu_kernel,
        out_shape=jax.ShapeDtypeStruct((H * W, Cout), jnp.float32),
        in_specs=[vmem, vmem, vmem],
        out_specs=vmem,
        cost_estimate=pl.CostEstimate(
            flops=flops, transcendentals=Cout, bytes_accessed=bytes_accessed),
    )(patch, w2, gb)

    # back to NCHW to match the PyTorch module boundary
    return jnp.transpose(out_flat.reshape(1, H, W, Cout), (0, 3, 1, 2))


def _reference(x_nchw, weight_oihw, gamma, beta):
    """Pure-JAX f32 reference (conv + train-mode BN + ReLU)."""
    y = jax.lax.conv_general_dilated(
        x_nchw, weight_oihw, window_strides=(1, 1), padding=((0, 0), (1, 1)),
        dimension_numbers=("NCHW", "OIHW", "NCHW"))
    mean = jnp.mean(y, axis=(0, 2, 3), keepdims=True)
    var = jnp.mean((y - mean) ** 2, axis=(0, 2, 3), keepdims=True)
    yn = (y - mean) * jax.lax.rsqrt(var + EPS)
    yn = yn * gamma[None, :, None, None] + beta[None, :, None, None]
    return jnp.maximum(yn, 0.0)


if __name__ == "__main__":
    key = jax.random.PRNGKey(0)
    kx, kw, kg, kb = jax.random.split(key, 4)

    N, Cin, Cout, H, W = 1, 384, 384, 5, 5
    x = jax.random.normal(kx, (N, Cin, H, W), dtype=jnp.float32)
    weight = jax.random.normal(kw, (Cout, Cin, 1, 3), dtype=jnp.float32) * 0.05
    gamma = 1.0 + 0.1 * jax.random.normal(kg, (Cout,), dtype=jnp.float32)
    beta = 0.1 * jax.random.normal(kb, (Cout,), dtype=jnp.float32)

    fused = jax.jit(conv_bn_relu)
    out = jax.block_until_ready(fused(x, weight, gamma, beta))

    ref = jax.block_until_ready(jax.jit(_reference)(x, weight, gamma, beta))
    assert out.shape == (N, Cout, H, W), out.shape
    # bf16 MXU operands (f32 accumulation) vs pure-f32 reference; BN renormalization
    # keeps the error small — expected max abs error ~1e-2.
    max_err = float(jnp.max(jnp.abs(out - ref)))
    assert max_err < 3e-2, max_err

    print("KERNEL_OK")
</pallas_src>

<mosaic_0001>
module attributes {stable_mosaic.version = 11 : i64} {
  func.func @conv_bn_relu_kernel(%arg0: memref<25x1152xbf16, #tpu.memory_space<vmem>>, %arg1: memref<1152x384xbf16, #tpu.memory_space<vmem>>, %arg2: memref<2x384xf32, #tpu.memory_space<vmem>>, %arg3: memref<25x384xf32, #tpu.memory_space<vmem>>) attributes {dimension_semantics = [], scalar_prefetch = 0 : i64, scratch_operands = 0 : i64, tpu.core_type = #tpu.core_type<tc>} {
    %c0 = arith.constant 0 : index
    %c0_0 = arith.constant 0 : index
    %0 = vector.load %arg0[%c0, %c0_0] : memref<25x1152xbf16, #tpu.memory_space<vmem>>, vector<25x1152xbf16>
    %c0_1 = arith.constant 0 : index
    %c0_2 = arith.constant 0 : index
    %1 = vector.load %arg1[%c0_1, %c0_2] : memref<1152x384xbf16, #tpu.memory_space<vmem>>, vector<1152x384xbf16>
    %cst = arith.constant dense<0.000000e+00> : vector<25x384xf32>
    %2 = tpu.matmul %0, %1, %cst {dimension_numbers = #tpu.dot_dimension_numbers<[1], [0], [0], [1], [0, 0, 1, 1], [], []>} : vector<25x1152xbf16>, vector<1152x384xbf16>, vector<25x384xf32> -> vector<25x384xf32>
    %c0_3 = arith.constant 0 : index
    %c0_4 = arith.constant 0 : index
    %3 = vector.load %arg2[%c0_3, %c0_4] : memref<2x384xf32, #tpu.memory_space<vmem>>, vector<2x384xf32>
    %4 = vector.extract_strided_slice %3 {offsets = [0, 0], sizes = [1, 384], strides = [1, 1]} : vector<2x384xf32> to vector<1x384xf32>
    %5 = vector.extract_strided_slice %3 {offsets = [1, 0], sizes = [1, 384], strides = [1, 1]} : vector<2x384xf32> to vector<1x384xf32>
    %cst_5 = arith.constant dense<0.000000e+00> : vector<384xf32>
    %6 = vector.multi_reduction <add>, %2, %cst_5 [0] : vector<25x384xf32> to vector<384xf32>
    %7 = vector.shape_cast %6 : vector<384xf32> to vector<1x384xf32>
    %cst_6 = arith.constant 4.000000e-02 : f32
    %8 = vector.broadcast %cst_6 : f32 to vector<1x384xf32>
    %9 = arith.mulf %7, %8 : vector<1x384xf32>
    %10 = vector.broadcast %9 : vector<1x384xf32> to vector<25x384xf32>
    %11 = arith.subf %2, %10 : vector<25x384xf32>
    %12 = arith.mulf %11, %11 : vector<25x384xf32>
    %cst_7 = arith.constant dense<0.000000e+00> : vector<384xf32>
    %13 = vector.multi_reduction <add>, %12, %cst_7 [0] : vector<25x384xf32> to vector<384xf32>
    %14 = vector.shape_cast %13 : vector<384xf32> to vector<1x384xf32>
    %cst_8 = arith.constant 4.000000e-02 : f32
    %15 = vector.broadcast %cst_8 : f32 to vector<1x384xf32>
    %16 = arith.mulf %14, %15 : vector<1x384xf32>
    %cst_9 = arith.constant 1.000000e-03 : f32
    %17 = vector.broadcast %cst_9 : f32 to vector<1x384xf32>
    %18 = arith.addf %16, %17 : vector<1x384xf32>
    %19 = math.rsqrt %18 : vector<1x384xf32>
    %20 = arith.mulf %19, %4 : vector<1x384xf32>
    %21 = vector.broadcast %20 : vector<1x384xf32> to vector<25x384xf32>
    %22 = arith.mulf %11, %21 : vector<25x384xf32>
    %23 = vector.broadcast %5 : vector<1x384xf32> to vector<25x384xf32>
    %24 = arith.addf %22, %23 : vector<25x384xf32>
    %cst_10 = arith.constant 0.000000e+00 : f32
    %25 = vector.broadcast %cst_10 : f32 to vector<25x384xf32>
    %26 = arith.maximumf %24, %25 : vector<25x384xf32>
    %c0_11 = arith.constant 0 : index
    %c0_12 = arith.constant 0 : index
    %27 = vector.load %arg3[%c0_11, %c0_12] : memref<25x384xf32, #tpu.memory_space<vmem>>, vector<25x384xf32>
    tpu.vector_store %arg3[%c0_11, %c0_12], %26 {strides = array<i32>} : memref<25x384xf32, #tpu.memory_space<vmem>>, vector<25x384xf32>,
    return
  }
}

</mosaic_0001>

<llo_original>
// kernel: conv_bn_relu.1
$region0: #{conv_bn_relu.1}
  #allocation0 [shape = 'u32[]', space=smem, size = 0x4, offset = 0x4, fixed_abs, tag = 'smem constant byte address 0x4 - core index']
  #allocation1 [shape = 'u32[72,128]{1,0:T(1,128)}', space=vmem, size = 0x9000, scoped, tag = 'internal scratch']
  %s0 = inlined_call_operand.vmem [shape: bf16[25,1152], index: 0, kind: input, shape index: {}]
  %s1 = inlined_call_operand.vmem [shape: bf16[1152,384], index: 1, kind: input, shape index: {}]
  %s2 = inlined_call_operand.vmem [shape: f32[2,384], index: 2, kind: input, shape index: {}]
  %s3 = inlined_call_operand.vmem [shape: f32[25,384], index: 3, kind: output, shape index: {}]
  %s4 = sld [smem:[#allocation0]]
  $region22: #{conv_bn_relu.1} parent=0
    _
  %s6 = ssub.s32 1, %s4
  %s7 = scalar_select 0, %s6, %s4
  // Predicated region
  $region2: #{conv_bn_relu.1} parent=0 // pred_check
    _
  $region3: #{conv_bn_relu.1} parent=0 // pred_check_branch
    %9 = sbr.rel (0) target = $region5
  $region4: #{conv_bn_relu.1} parent=0 // pred_region
    _
  $region5: #{conv_bn_relu.1} parent=0 // pred_fallthru
    _
  // Predicated region
  $region6: #{conv_bn_relu.1} parent=0 // pred_check
    _
  $region7: #{conv_bn_relu.1} parent=0 // pred_check_branch
    %11 = sbr.rel (0) target = $region9
  $region8: #{conv_bn_relu.1} parent=0 // pred_region
    _
  $region9: #{conv_bn_relu.1} parent=0 // pred_fallthru
    _
  // Predicated region
  $region10: #{conv_bn_relu.1} parent=0 // pred_check
    _
  $region11: #{conv_bn_relu.1} parent=0 // pred_check_branch
    %13 = sbr.rel (0) target = $region13
  $region12: #{conv_bn_relu.1} parent=0 // pred_region
    _
  $region13: #{conv_bn_relu.1} parent=0 // pred_fallthru
    _
  %v14 = vld [vmem:[%s0] sm:$0xff]
  %v15 = vld [vmem:[%s0 + $0x8] sm:$0xff]
  %v16 = vld [vmem:[%s0 + $0x10] sm:$0xff]
  %v17 = vld [vmem:[%s0 + $0x18] sm:$0xff]
  %v18 = vld [vmem:[%s0 + $0x20] sm:$0xf]
  %v19 = vld [vmem:[%s0 + $0x24] sm:$0xff]
  %v20 = vld [vmem:[%s0 + $0x2c] sm:$0xff]
  %v21 = vld [vmem:[%s0 + $0x34] sm:$0xff]
  %v22 = vld [vmem:[%s0 + $0x3c] sm:$0xff]
  %v23 = vld [vmem:[%s0 + $0x44] sm:$0xf]
  %v24 = vld [vmem:[%s0 + $0x48] sm:$0xff]
  %v25 = vld [vmem:[%s0 + $0x50] sm:$0xff]
  %v26 = vld [vmem:[%s0 + $0x58] sm:$0xff]
  %v27 = vld [vmem:[%s0 + $0x60] sm:$0xff]
  %v28 = vld [vmem:[%s0 + $0x68] sm:$0xf]
  %v29 = vld [vmem:[%s0 + $0x6c] sm:$0x11]
  %v30 = vld [vmem:[%s0 + $0x74] sm:$0x11]
  %v31 = vld [vmem:[%s0 + $0x7c] sm:$0x11]
  %v32 = vld [vmem:[%s0 + $0x84] sm:$0x11]
  %v33 = vld [vmem:[%s0 + $0x8c] sm:$0x1]
  %v34 = vld [vmem:[%s1] sm:$0xff]
  %v35 = vld [vmem:[%s1 + $0x8] sm:$0xf]
  %v36 = vld [vmem:[%s1 + $0xc] sm:$0xff]
  %v37 = vld [vmem:[%s1 + $0x14] sm:$0xf]
  %v38 = vld [vmem:[%s1 + $0x18] sm:$0xff]
  %v39 = vld [vmem:[%s1 + $0x20] sm:$0xf]
  %v40 = vld [vmem:[%s1 + $0x24] sm:$0xff]
  %v41 = vld [vmem:[%s1 + $0x2c] sm:$0xf]
  %v42 = vld [vmem:[%s1 + $0x30] sm:$0xff]
  %v43 = vld [vmem:[%s1 + $0x38] sm:$0xf]
  %v44 = vld [vmem:[%s1 + $0x3c] sm:$0xff]
  %v45 = vld [vmem:[%s1 + $0x44] sm:$0xf]
  %v46 = vld [vmem:[%s1 + $0x48] sm:$0xff]
  %v47 = vld [vmem:[%s1 + $0x50] sm:$0xf]
  %v48 = vld [vmem:[%s1 + $0x54] sm:$0xff]
  %v49 = vld [vmem:[%s1 + $0x5c] sm:$0xf]
  %v50 = vld [vmem:[%s1 + $0x60] sm:$0xff]
  %v51 = vld [vmem:[%s1 + $0x68] sm:$0xf]
  %v52 = vld [vmem:[%s1 + $0x6c] sm:$0xff]
  %v53 = vld [vmem:[%s1 + $0x74] sm:$0xf]
  %v54 = vld [vmem:[%s1 + $0x78] sm:$0xff]
  %v55 = vld [vmem:[%s1 + $0x80] sm:$0xf]
  %v56 = vld [vmem:[%s1 + $0x84] sm:$0xff]
  %v57 = vld [vmem:[%s1 + $0x8c] sm:$0xf]
  %v58 = vld [vmem:[%s1 + $0x90] sm:$0xff]
  %v59 = vld [vmem:[%s1 + $0x98] sm:$0xf]
  %v60 = vld [vmem:[%s1 + $0x9c] sm:$0xff]
  %v61 = vld [vmem:[%s1 + $0xa4] sm:$0xf]
  %v62 = vld [vmem:[%s1 + $0xa8] sm:$0xff]
  %v63 = vld [vmem:[%s1 + $0xb0] sm:$0xf]
  %v64 = vld [vmem:[%s1 + $0xb4] sm:$0xff]
  %v65 = vld [vmem:[%s1 + $0xbc] sm:$0xf]
  %v66 = vld [vmem:[%s1 + $0xc0] sm:$0xff]
  %v67 = vld [vmem:[%s1 + $0xc8] sm:$0xf]
  %v68 = vld [vmem:[%s1 + $0xcc] sm:$0xff]
  %v69 = vld [vmem:[%s1 + $0xd4] sm:$0xf]
  %v70 = vld [vmem:[%s1 + $0xd8] sm:$0xff]
  %v71 = vld [vmem:[%s1 + $0xe0] sm:$0xf]
  %v72 = vld [vmem:[%s1 + $0xe4] sm:$0xff]
  %v73 = vld [vmem:[%s1 + $0xec] sm:$0xf]
  %v74 = vld [vmem:[%s1 + $0xf0] sm:$0xff]
  %v75 = vld [vmem:[%s1 + $0xf8] sm:$0xf]
  %v76 = vld [vmem:[%s1 + $0xfc] sm:$0xff]
  %v77 = vld [vmem:[%s1 + $0x104] sm:$0xf]
  %v78 = vld [vmem:[%s1 + $0x108] sm:$0xff]
  %v79 = vld [vmem:[%s1 + $0x110] sm:$0xf]
  %v80 = vld [vmem:[%s1 + $0x114] sm:$0xff]
  %v81 = vld [vmem:[%s1 + $0x11c] sm:$0xf]
  %v82 = vld [vmem:[%s1 + $0x120] sm:$0xff]
  %v83 = vld [vmem:[%s1 + $0x128] sm:$0xf]
  %v84 = vld [vmem:[%s1 + $0x12c] sm:$0xff]
  %v85 = vld [vmem:[%s1 + $0x134] sm:$0xf]
  %v86 = vld [vmem:[%s1 + $0x138] sm:$0xff]
  %v87 = vld [vmem:[%s1 + $0x140] sm:$0xf]
  %v88 = vld [vmem:[%s1 + $0x144] sm:$0xff]
  %v89 = vld [vmem:[%s1 + $0x14c] sm:$0xf]
  %v90 = vld [vmem:[%s1 + $0x150] sm:$0xff]
  %v91 = vld [vmem:[%s1 + $0x158] sm:$0xf]
  %v92 = vld [vmem:[%s1 + $0x15c] sm:$0xff]
  %v93 = vld [vmem:[%s1 + $0x164] sm:$0xf]
  %v94 = vld [vmem:[%s1 + $0x168] sm:$0xff]
  %v95 = vld [vmem:[%s1 + $0x170] sm:$0xf]
  %v96 = vld [vmem:[%s1 + $0x174] sm:$0xff]
  %v97 = vld [vmem:[%s1 + $0x17c] sm:$0xf]
  %v98 = vld [vmem:[%s1 + $0x180] sm:$0xff]
  %v99 = vld [vmem:[%s1 + $0x188] sm:$0xf]
  %v100 = vld [vmem:[%s1 + $0x18c] sm:$0xff]
  %v101 = vld [vmem:[%s1 + $0x194] sm:$0xf]
  %v102 = vld [vmem:[%s1 + $0x198] sm:$0xff]
  %v103 = vld [vmem:[%s1 + $0x1a0] sm:$0xf]
  %v104 = vld [vmem:[%s1 + $0x1a4] sm:$0xff]
  %v105 = vld [vmem:[%s1 + $0x1ac] sm:$0xf]
  %v106 = vld [vmem:[%s1 + $0x1b0] sm:$0xff]
  %v107 = vld [vmem:[%s1 + $0x1b8] sm:$0xf]
  %v108 = vld [vmem:[%s1 + $0x1bc] sm:$0xff]
  %v109 = vld [vmem:[%s1 + $0x1c4] sm:$0xf]
  %v110 = vld [vmem:[%s1 + $0x1c8] sm:$0xff]
  %v111 = vld [vmem:[%s1 + $0x1d0] sm:$0xf]
  %v112 = vld [vmem:[%s1 + $0x1d4] sm:$0xff]
  %v113 = vld [vmem:[%s1 + $0x1dc] sm:$0xf]
  %v114 = vld [vmem:[%s1 + $0x1e0] sm:$0xff]
  %v115 = vld [vmem:[%s1 + $0x1e8] sm:$0xf]
  %v116 = vld [vmem:[%s1 + $0x1ec] sm:$0xff]
  %v117 = vld [vmem:[%s1 + $0x1f4] sm:$0xf]
  %v118 = vld [vmem:[%s1 + $0x1f8] sm:$0xff]
  %v119 = vld [vmem:[%s1 + $0x200] sm:$0xf]
  %v120 = vld [vmem:[%s1 + $0x204] sm:$0xff]
  %v121 = vld [vmem:[%s1 + $0x20c] sm:$0xf]
  %v122 = vld [vmem:[%s1 + $0x210] sm:$0xff]
  %v123 = vld [vmem:[%s1 + $0x218] sm:$0xf]
  %v124 = vld [vmem:[%s1 + $0x21c] sm:$0xff]
  %v125 = vld [vmem:[%s1 + $0x224] sm:$0xf]
  %v126 = vld [vmem:[%s1 + $0x228] sm:$0xff]
  %v127 = vld [vmem:[%s1 + $0x230] sm:$0xf]
  %v128 = vld [vmem:[%s1 + $0x234] sm:$0xff]
  %v129 = vld [vmem:[%s1 + $0x23c] sm:$0xf]
  %v130 = vld [vmem:[%s1 + $0x240] sm:$0xff]
  %v131 = vld [vmem:[%s1 + $0x248] sm:$0xf]
  %v132 = vld [vmem:[%s1 + $0x24c] sm:$0xff]
  %v133 = vld [vmem:[%s1 + $0x254] sm:$0xf]
  %v134 = vld [vmem:[%s1 + $0x258] sm:$0xff]
  %v135 = vld [vmem:[%s1 + $0x260] sm:$0xf]
  %v136 = vld [vmem:[%s1 + $0x264] sm:$0xff]
  %v137 = vld [vmem:[%s1 + $0x26c] sm:$0xf]
  %v138 = vld [vmem:[%s1 + $0x270] sm:$0xff]
  %v139 = vld [vmem:[%s1 + $0x278] sm:$0xf]
  %v140 = vld [vmem:[%s1 + $0x27c] sm:$0xff]
  %v141 = vld [vmem:[%s1 + $0x284] sm:$0xf]
  %v142 = vld [vmem:[%s1 + $0x288] sm:$0xff]
  %v143 = vld [vmem:[%s1 + $0x290] sm:$0xf]
  %v144 = vld [vmem:[%s1 + $0x294] sm:$0xff]
  %v145 = vld [vmem:[%s1 + $0x29c] sm:$0xf]
  %v146 = vld [vmem:[%s1 + $0x2a0] sm:$0xff]
  %v147 = vld [vmem:[%s1 + $0x2a8] sm:$0xf]
  %v148 = vld [vmem:[%s1 + $0x2ac] sm:$0xff]
  %v149 = vld [vmem:[%s1 + $0x2b4] sm:$0xf]
  %v150 = vld [vmem:[%s1 + $0x2b8] sm:$0xff]
  %v151 = vld [vmem:[%s1 + $0x2c0] sm:$0xf]
  %v152 = vld [vmem:[%s1 + $0x2c4] sm:$0xff]
  %v153 = vld [vmem:[%s1 + $0x2cc] sm:$0xf]
  %v154 = vld [vmem:[%s1 + $0x2d0] sm:$0xff]
  %v155 = vld [vmem:[%s1 + $0x2d8] sm:$0xf]
  %v156 = vld [vmem:[%s1 + $0x2dc] sm:$0xff]
  %v157 = vld [vmem:[%s1 + $0x2e4] sm:$0xf]
  %v158 = vld [vmem:[%s1 + $0x2e8] sm:$0xff]
  %v159 = vld [vmem:[%s1 + $0x2f0] sm:$0xf]
  %v160 = vld [vmem:[%s1 + $0x2f4] sm:$0xff]
  %v161 = vld [vmem:[%s1 + $0x2fc] sm:$0xf]
  %v162 = vld [vmem:[%s1 + $0x300] sm:$0xff]
  %v163 = vld [vmem:[%s1 + $0x308] sm:$0xf]
  %v164 = vld [vmem:[%s1 + $0x30c] sm:$0xff]
  %v165 = vld [vmem:[%s1 + $0x314] sm:$0xf]
  %v166 = vld [vmem:[%s1 + $0x318] sm:$0xff]
  %v167 = vld [vmem:[%s1 + $0x320] sm:$0xf]
  %v168 = vld [vmem:[%s1 + $0x324] sm:$0xff]
  %v169 = vld [vmem:[%s1 + $0x32c] sm:$0xf]
  %v170 = vld [vmem:[%s1 + $0x330] sm:$0xff]
  %v171 = vld [vmem:[%s1 + $0x338] sm:$0xf]
  %v172 = vld [vmem:[%s1 + $0x33c] sm:$0xff]
  %v173 = vld [vmem:[%s1 + $0x344] sm:$0xf]
  %v174 = vld [vmem:[%s1 + $0x348] sm:$0xff]
  %v175 = vld [vmem:[%s1 + $0x350] sm:$0xf]
  %v176 = vld [vmem:[%s1 + $0x354] sm:$0xff]
  %v177 = vld [vmem:[%s1 + $0x35c] sm:$0xf]
  %v178 = vld [vmem:[%s1 + $0x360] sm:$0xff]
  %v179 = vld [vmem:[%s1 + $0x368] sm:$0xf]
  %v180 = vld [vmem:[%s1 + $0x36c] sm:$0xff]
  %v181 = vld [vmem:[%s1 + $0x374] sm:$0xf]
  %v182 = vld [vmem:[%s1 + $0x378] sm:$0xff]
  %v183 = vld [vmem:[%s1 + $0x380] sm:$0xf]
  %v184 = vld [vmem:[%s1 + $0x384] sm:$0xff]
  %v185 = vld [vmem:[%s1 + $0x38c] sm:$0xf]
  %v186 = vld [vmem:[%s1 + $0x390] sm:$0xff]
  %v187 = vld [vmem:[%s1 + $0x398] sm:$0xf]
  %v188 = vld [vmem:[%s1 + $0x39c] sm:$0xff]
  %v189 = vld [vmem:[%s1 + $0x3a4] sm:$0xf]
  %v190 = vld [vmem:[%s1 + $0x3a8] sm:$0xff]
  %v191 = vld [vmem:[%s1 + $0x3b0] sm:$0xf]
  %v192 = vld [vmem:[%s1 + $0x3b4] sm:$0xff]
  %v193 = vld [vmem:[%s1 + $0x3bc] sm:$0xf]
  %v194 = vld [vmem:[%s1 + $0x3c0] sm:$0xff]
  %v195 = vld [vmem:[%s1 + $0x3c8] sm:$0xf]
  %v196 = vld [vmem:[%s1 + $0x3cc] sm:$0xff]
  %v197 = vld [vmem:[%s1 + $0x3d4] sm:$0xf]
  %v198 = vld [vmem:[%s1 + $0x3d8] sm:$0xff]
  %v199 = vld [vmem:[%s1 + $0x3e0] sm:$0xf]
  %v200 = vld [vmem:[%s1 + $0x3e4] sm:$0xff]
  %v201 = vld [vmem:[%s1 + $0x3ec] sm:$0xf]
  %v202 = vld [vmem:[%s1 + $0x3f0] sm:$0xff]
  %v203 = vld [vmem:[%s1 + $0x3f8] sm:$0xf]
  %v204 = vld [vmem:[%s1 + $0x3fc] sm:$0xff]
  %v205 = vld [vmem:[%s1 + $0x404] sm:$0xf]
  %v206 = vld [vmem:[%s1 + $0x408] sm:$0xff]
  %v207 = vld [vmem:[%s1 + $0x410] sm:$0xf]
  %v208 = vld [vmem:[%s1 + $0x414] sm:$0xff]
  %v209 = vld [vmem:[%s1 + $0x41c] sm:$0xf]
  %v210 = vld [vmem:[%s1 + $0x420] sm:$0xff]
  %v211 = vld [vmem:[%s1 + $0x428] sm:$0xf]
  %v212 = vld [vmem:[%s1 + $0x42c] sm:$0xff]
  %v213 = vld [vmem:[%s1 + $0x434] sm:$0xf]
  %v214 = vld [vmem:[%s1 + $0x438] sm:$0xff]
  %v215 = vld [vmem:[%s1 + $0x440] sm:$0xf]
  %v216 = vld [vmem:[%s1 + $0x444] sm:$0xff]
  %v217 = vld [vmem:[%s1 + $0x44c] sm:$0xf]
  %v218 = vld [vmem:[%s1 + $0x450] sm:$0xff]
  %v219 = vld [vmem:[%s1 + $0x458] sm:$0xf]
  %v220 = vld [vmem:[%s1 + $0x45c] sm:$0xff]
  %v221 = vld [vmem:[%s1 + $0x464] sm:$0xf]
  %v222 = vld [vmem:[%s1 + $0x468] sm:$0xff]
  %v223 = vld [vmem:[%s1 + $0x470] sm:$0xf]
  %v224 = vld [vmem:[%s1 + $0x474] sm:$0xff]
  %v225 = vld [vmem:[%s1 + $0x47c] sm:$0xf]
  %v226 = vld [vmem:[%s1 + $0x480] sm:$0xff]
  %v227 = vld [vmem:[%s1 + $0x488] sm:$0xf]
  %v228 = vld [vmem:[%s1 + $0x48c] sm:$0xff]
  %v229 = vld [vmem:[%s1 + $0x494] sm:$0xf]
  %v230 = vld [vmem:[%s1 + $0x498] sm:$0xff]
  %v231 = vld [vmem:[%s1 + $0x4a0] sm:$0xf]
  %v232 = vld [vmem:[%s1 + $0x4a4] sm:$0xff]
  %v233 = vld [vmem:[%s1 + $0x4ac] sm:$0xf]
  %v234 = vld [vmem:[%s1 + $0x4b0] sm:$0xff]
  %v235 = vld [vmem:[%s1 + $0x4b8] sm:$0xf]
  %v236 = vld [vmem:[%s1 + $0x4bc] sm:$0xff]
  %v237 = vld [vmem:[%s1 + $0x4c4] sm:$0xf]
  %v238 = vld [vmem:[%s1 + $0x4c8] sm:$0xff]
  %v239 = vld [vmem:[%s1 + $0x4d0] sm:$0xf]
  %v240 = vld [vmem:[%s1 + $0x4d4] sm:$0xff]
  %v241 = vld [vmem:[%s1 + $0x4dc] sm:$0xf]
  %v242 = vld [vmem:[%s1 + $0x4e0] sm:$0xff]
  %v243 = vld [vmem:[%s1 + $0x4e8] sm:$0xf]
  %v244 = vld [vmem:[%s1 + $0x4ec] sm:$0xff]
  %v245 = vld [vmem:[%s1 + $0x4f4] sm:$0xf]
  %v246 = vld [vmem:[%s1 + $0x4f8] sm:$0xff]
  %v247 = vld [vmem:[%s1 + $0x500] sm:$0xf]
  %v248 = vld [vmem:[%s1 + $0x504] sm:$0xff]
  %v249 = vld [vmem:[%s1 + $0x50c] sm:$0xf]
  %v250 = vld [vmem:[%s1 + $0x510] sm:$0xff]
  %v251 = vld [vmem:[%s1 + $0x518] sm:$0xf]
  %v252 = vld [vmem:[%s1 + $0x51c] sm:$0xff]
  %v253 = vld [vmem:[%s1 + $0x524] sm:$0xf]
  %v254 = vld [vmem:[%s1 + $0x528] sm:$0xff]
  %v255 = vld [vmem:[%s1 + $0x530] sm:$0xf]
  %v256 = vld [vmem:[%s1 + $0x534] sm:$0xff]
  %v257 = vld [vmem:[%s1 + $0x53c] sm:$0xf]
  %v258 = vld [vmem:[%s1 + $0x540] sm:$0xff]
  %v259 = vld [vmem:[%s1 + $0x548] sm:$0xf]
  %v260 = vld [vmem:[%s1 + $0x54c] sm:$0xff]
  %v261 = vld [vmem:[%s1 + $0x554] sm:$0xf]
  %v262 = vld [vmem:[%s1 + $0x558] sm:$0xff]
  %v263 = vld [vmem:[%s1 + $0x560] sm:$0xf]
  %v264 = vld [vmem:[%s1 + $0x564] sm:$0xff]
  %v265 = vld [vmem:[%s1 + $0x56c] sm:$0xf]
  %v266 = vld [vmem:[%s1 + $0x570] sm:$0xff]
  %v267 = vld [vmem:[%s1 + $0x578] sm:$0xf]
  %v268 = vld [vmem:[%s1 + $0x57c] sm:$0xff]
  %v269 = vld [vmem:[%s1 + $0x584] sm:$0xf]
  %v270 = vld [vmem:[%s1 + $0x588] sm:$0xff]
  %v271 = vld [vmem:[%s1 + $0x590] sm:$0xf]
  %v272 = vld [vmem:[%s1 + $0x594] sm:$0xff]
  %v273 = vld [vmem:[%s1 + $0x59c] sm:$0xf]
  %v274 = vld [vmem:[%s1 + $0x5a0] sm:$0xff]
  %v275 = vld [vmem:[%s1 + $0x5a8] sm:$0xf]
  %v276 = vld [vmem:[%s1 + $0x5ac] sm:$0xff]
  %v277 = vld [vmem:[%s1 + $0x5b4] sm:$0xf]
  %v278 = vld [vmem:[%s1 + $0x5b8] sm:$0xff]
  %v279 = vld [vmem:[%s1 + $0x5c0] sm:$0xf]
  %v280 = vld [vmem:[%s1 + $0x5c4] sm:$0xff]
  %v281 = vld [vmem:[%s1 + $0x5cc] sm:$0xf]
  %v282 = vld [vmem:[%s1 + $0x5d0] sm:$0xff]
  %v283 = vld [vmem:[%s1 + $0x5d8] sm:$0xf]
  %v284 = vld [vmem:[%s1 + $0x5dc] sm:$0xff]
  %v285 = vld [vmem:[%s1 + $0x5e4] sm:$0xf]
  %v286 = vld [vmem:[%s1 + $0x5e8] sm:$0xff]
  %v287 = vld [vmem:[%s1 + $0x5f0] sm:$0xf]
  %v288 = vld [vmem:[%s1 + $0x5f4] sm:$0xff]
  %v289 = vld [vmem:[%s1 + $0x5fc] sm:$0xf]
  %v290 = vld [vmem:[%s1 + $0x600] sm:$0xff]
  %v291 = vld [vmem:[%s1 + $0x608] sm:$0xf]
  %v292 = vld [vmem:[%s1 + $0x60c] sm:$0xff]
  %v293 = vld [vmem:[%s1 + $0x614] sm:$0xf]
  %v294 = vld [vmem:[%s1 + $0x618] sm:$0xff]
  %v295 = vld [vmem:[%s1 + $0x620] sm:$0xf]
  %v296 = vld [vmem:[%s1 + $0x624] sm:$0xff]
  %v297 = vld [vmem:[%s1 + $0x62c] sm:$0xf]
  %v298 = vld [vmem:[%s1 + $0x630] sm:$0xff]
  %v299 = vld [vmem:[%s1 + $0x638] sm:$0xf]
  %v300 = vld [vmem:[%s1 + $0x63c] sm:$0xff]
  %v301 = vld [vmem:[%s1 + $0x644] sm:$0xf]
  %v302 = vld [vmem:[%s1 + $0x648] sm:$0xff]
  %v303 = vld [vmem:[%s1 + $0x650] sm:$0xf]
  %v304 = vld [vmem:[%s1 + $0x654] sm:$0xff]
  %v305 = vld [vmem:[%s1 + $0x65c] sm:$0xf]
  %v306 = vld [vmem:[%s1 + $0x660] sm:$0xff]
  %v307 = vld [vmem:[%s1 + $0x668] sm:$0xf]
  %v308 = vld [vmem:[%s1 + $0x66c] sm:$0xff]
  %v309 = vld [vmem:[%s1 + $0x674] sm:$0xf]
  %v310 = vld [vmem:[%s1 + $0x678] sm:$0xff]
  %v311 = vld [vmem:[%s1 + $0x680] sm:$0xf]
  %v312 = vld [vmem:[%s1 + $0x684] sm:$0xff]
  %v313 = vld [vmem:[%s1 + $0x68c] sm:$0xf]
  %v314 = vld [vmem:[%s1 + $0x690] sm:$0xff]
  %v315 = vld [vmem:[%s1 + $0x698] sm:$0xf]
  %v316 = vld [vmem:[%s1 + $0x69c] sm:$0xff]
  %v317 = vld [vmem:[%s1 + $0x6a4] sm:$0xf]
  %v318 = vld [vmem:[%s1 + $0x6a8] sm:$0xff]
  %v319 = vld [vmem:[%s1 + $0x6b0] sm:$0xf]
  %v320 = vld [vmem:[%s1 + $0x6b4] sm:$0xff]
  %v321 = vld [vmem:[%s1 + $0x6bc] sm:$0xf]
  %v342 = vunpack.c.l.b16 %v14
  %v343 = vunpack.c.h.b16 %v14
  %v344 = vunpack.c.l.b16 %v15
  %v345 = vunpack.c.h.b16 %v15
  %v346 = vunpack.c.l.b16 %v16
  %v347 = vunpack.c.h.b16 %v16
  %v348 = vunpack.c.l.b16 %v17
  %v349 = vunpack.c.h.b16 %v17
  %v350 = vunpack.c.l.b16 %v18
  %v351 = vunpack.c.l.b16 %v19
  %v352 = vunpack.c.h.b16 %v19
  %v353 = vunpack.c.l.b16 %v20
  %v354 = vunpack.c.h.b16 %v20
  %v355 = vunpack.c.l.b16 %v21
  %v356 = vunpack.c.h.b16 %v21
  %v357 = vunpack.c.l.b16 %v22
  %v358 = vunpack.c.h.b16 %v22
  %v359 = vunpack.c.l.b16 %v23
  %v360 = vunpack.c.l.b16 %v24
  %v361 = vunpack.c.h.b16 %v24
  %v362 = vunpack.c.l.b16 %v25
  %v363 = vunpack.c.h.b16 %v25
  %v364 = vunpack.c.l.b16 %v26
  %v365 = vunpack.c.h.b16 %v26
  %v366 = vunpack.c.l.b16 %v27
  %v367 = vunpack.c.h.b16 %v27
  %v368 = vunpack.c.l.b16 %v28
  %v369 = vunpack.c.l.b16 %v29
  %v370 = vunpack.c.h.b16 %v29
  %v371 = vunpack.c.l.b16 %v30
  %v372 = vunpack.c.h.b16 %v30
  %v373 = vunpack.c.l.b16 %v31
  %v374 = vunpack.c.h.b16 %v31
  %v375 = vunpack.c.l.b16 %v32
  %v376 = vunpack.c.h.b16 %v32
  %v377 = vunpack.c.l.b16 %v33
  %v378 = vpack.c.b16 %v351, %v342
  %v379 = vpack.c.b16 %v352, %v343
  %v380 = vpack.c.b16 %v353, %v344
  %v381 = vpack.c.b16 %v354, %v345
  %v382 = vpack.c.b16 %v355, %v346
  %v383 = vpack.c.b16 %v356, %v347
  %v384 = vpack.c.b16 %v357, %v348
  %v385 = vpack.c.b16 %v358, %v349
  %v386 = vpack.c.b16 %v359, %v350
  %v387 = vpack.c.b16 %v369, %v360
  %v388 = vpack.c.b16 %v370, %v361
  %v389 = vpack.c.b16 %v371, %v362
  %v390 = vpack.c.b16 %v372, %v363
  %v391 = vpack.c.b16 %v373, %v364
  %v392 = vpack.c.b16 %v374, %v365
  %v393 = vpack.c.b16 %v375, %v366
  %v394 = vpack.c.b16 %v376, %v367
  %v395 = vpack.c.b16 %v377, %v368
  %v702 = vunpack.c.l.b16 %v34
  %v703 = vunpack.c.h.b16 %v34
  %v704 = vunpack.c.l.b16 %v35
  %v705 = vunpack.c.l.b16 %v36
  %v706 = vunpack.c.h.b16 %v36
  %v707 = vunpack.c.l.b16 %v37
  %v708 = vunpack.c.l.b16 %v38
  %v709 = vunpack.c.h.b16 %v38
  %v710 = vunpack.c.l.b16 %v39
  %v711 = vunpack.c.l.b16 %v40
  %v712 = vunpack.c.h.b16 %v40
  %v713 = vunpack.c.l.b16 %v41
  %v714 = vunpack.c.l.b16 %v42
  %v715 = vunpack.c.h.b16 %v42
  %v716 = vunpack.c.l.b16 %v43
  %v717 = vunpack.c.l.b16 %v44
  %v718 = vunpack.c.h.b16 %v44
  %v719 = vunpack.c.l.b16 %v45
  %v720 = vunpack.c.l.b16 %v46
  %v721 = vunpack.c.h.b16 %v46
  %v722 = vunpack.c.l.b16 %v47
  %v723 = vunpack.c.l.b16 %v48
  %v724 = vunpack.c.h.b16 %v48
  %v725 = vunpack.c.l.b16 %v49
  %v726 = vunpack.c.l.b16 %v50
  %v727 = vunpack.c.h.b16 %v50
  %v728 = vunpack.c.l.b16 %v51
  %v729 = vunpack.c.l.b16 %v52
  %v730 = vunpack.c.h.b16 %v52
  %v731 = vunpack.c.l.b16 %v53
  %v732 = vunpack.c.l.b16 %v54
  %v733 = vunpack.c.h.b16 %v54
  %v734 = vunpack.c.l.b16 %v55
  %v735 = vunpack.c.l.b16 %v56
  %v736 = vunpack.c.h.b16 %v56
  %v737 = vunpack.c.l.b16 %v57
  %v738 = vunpack.c.l.b16 %v58
  %v739 = vunpack.c.h.b16 %v58
  %v740 = vunpack.c.l.b16 %v59
  %v741 = vunpack.c.l.b16 %v60
  %v742 = vunpack.c.h.b16 %v60
  %v743 = vunpack.c.l.b16 %v61
  %v744 = vunpack.c.l.b16 %v62
  %v745 = vunpack.c.h.b16 %v62
  %v746 = vunpack.c.l.b16 %v63
  %v747 = vunpack.c.l.b16 %v64
  %v748 = vunpack.c.h.b16 %v64
  %v749 = vunpack.c.l.b16 %v65
  %v750 = vunpack.c.l.b16 %v66
  %v751 = vunpack.c.h.b16 %v66
  %v752 = vunpack.c.l.b16 %v67
  %v753 = vunpack.c.l.b16 %v68
  %v754 = vunpack.c.h.b16 %v68
  %v755 = vunpack.c.l.b16 %v69
  %v756 = vunpack.c.l.b16 %v70
  %v757 = vunpack.c.h.b16 %v70
  %v758 = vunpack.c.l.b16 %v71
  %v759 = vunpack.c.l.b16 %v72
  %v760 = vunpack.c.h.b16 %v72
  %v761 = vunpack.c.l.b16 %v73
  %v762 = vunpack.c.l.b16 %v74
  %v763 = vunpack.c.h.b16 %v74
  %v764 = vunpack.c.l.b16 %v75
  %v765 = vunpack.c.l.b16 %v76
  %v766 = vunpack.c.h.b16 %v76
  %v767 = vunpack.c.l.b16 %v77
  %v768 = vunpack.c.l.b16 %v78
  %v769 = vunpack.c.h.b16 %v78
  %v770 = vunpack.c.l.b16 %v79
  %v771 = vunpack.c.l.b16 %v80
  %v772 = vunpack.c.h.b16 %v80
  %v773 = vunpack.c.l.b16 %v81
  %v774 = vunpack.c.l.b16 %v82
  %v775 = vunpack.c.h.b16 %v82
  %v776 = vunpack.c.l.b16 %v83
  %v777 = vunpack.c.l.b16 %v84
  %v778 = vunpack.c.h.b16 %v84
  %v779 = vunpack.c.l.b16 %v85
  %v780 = vunpack.c.l.b16 %v86
  %v781 = vunpack.c.h.b16 %v86
  %v782 = vunpack.c.l.b16 %v87
  %v783 = vunpack.c.l.b16 %v88
  %v784 = vunpack.c.h.b16 %v88
  %v785 = vunpack.c.l.b16 %v89
  %v786 = vunpack.c.l.b16 %v90
  %v787 = vunpack.c.h.b16 %v90
  %v788 = vunpack.c.l.b16 %v91
  %v789 = vunpack.c.l.b16 %v92
  %v790 = vunpack.c.h.b16 %v92
  %v791 = vunpack.c.l.b16 %v93
  %v792 = vunpack.c.l.b16 %v94
  %v793 = vunpack.c.h.b16 %v94
  %v794 = vunpack.c.l.b16 %v95
  %v795 = vunpack.c.l.b16 %v96
  %v796 = vunpack.c.h.b16 %v96
  %v797 = vunpack.c.l.b16 %v97
  %v798 = vunpack.c.l.b16 %v98
  %v799 = vunpack.c.h.b16 %v98
  %v800 = vunpack.c.l.b16 %v99
  %v801 = vunpack.c.l.b16 %v100
  %v802 = vunpack.c.h.b16 %v100
  %v803 = vunpack.c.l.b16 %v101
  %v804 = vunpack.c.l.b16 %v102
  %v805 = vunpack.c.h.b16 %v102
  %v806 = vunpack.c.l.b16 %v103
  %v807 = vunpack.c.l.b16 %v104
  %v808 = vunpack.c.h.b16 %v104
  %v809 = vunpack.c.l.b16 %v105
  %v810 = vunpack.c.l.b16 %v106
  %v811 = vunpack.c.h.b16 %v106
  %v812 = vunpack.c.l.b16 %v107
  %v813 = vunpack.c.l.b16 %v108
  %v814 = vunpack.c.h.b16 %v108
  %v815 = vunpack.c.l.b16 %v109
  %v816 = vunpack.c.l.b16 %v110
  %v817 = vunpack.c.h.b16 %v110
  %v818 = vunpack.c.l.b16 %v111
  %v819 = vunpack.c.l.b16 %v112
  %v820 = vunpack.c.h.b16 %v112
  %v821 = vunpack.c.l.b16 %v113
  %v822 = vunpack.c.l.b16 %v114
  %v823 = vunpack.c.h.b16 %v114
  %v824 = vunpack.c.l.b16 %v115
  %v825 = vunpack.c.l.b16 %v116
  %v826 = vunpack.c.h.b16 %v116
  %v827 = vunpack.c.l.b16 %v117
  %v828 = vunpack.c.l.b16 %v118
  %v829 = vunpack.c.h.b16 %v118
  %v830 = vunpack.c.l.b16 %v119
  %v831 = vunpack.c.l.b16 %v120
  %v832 = vunpack.c.h.b16 %v120
  %v833 = vunpack.c.l.b16 %v121
  %v834 = vunpack.c.l.b16 %v122
  %v835 = vunpack.c.h.b16 %v122
  %v836 = vunpack.c.l.b16 %v123
  %v837 = vunpack.c.l.b16 %v124
  %v838 = vunpack.c.h.b16 %v124
  %v839 = vunpack.c.l.b16 %v125
  %v840 = vunpack.c.l.b16 %v126
  %v841 = vunpack.c.h.b16 %v126
  %v842 = vunpack.c.l.b16 %v127
  %v843 = vunpack.c.l.b16 %v128
  %v844 = vunpack.c.h.b16 %v128
  %v845 = vunpack.c.l.b16 %v129
  %v846 = vunpack.c.l.b16 %v130
  %v847 = vunpack.c.h.b16 %v130
  %v848 = vunpack.c.l.b16 %v131
  %v849 = vunpack.c.l.b16 %v132
  %v850 = vunpack.c.h.b16 %v132
  %v851 = vunpack.c.l.b16 %v133
  %v852 = vunpack.c.l.b16 %v134
  %v853 = vunpack.c.h.b16 %v134
  %v854 = vunpack.c.l.b16 %v135
  %v855 = vunpack.c.l.b16 %v136
  %v856 = vunpack.c.h.b16 %v136
  %v857 = vunpack.c.l.b16 %v137
  %v858 = vunpack.c.l.b16 %v138
  %v859 = vunpack.c.h.b16 %v138
  %v860 = vunpack.c.l.b16 %v139
  %v861 = vunpack.c.l.b16 %v140
  %v862 = vunpack.c.h.b16 %v140
  %v863 = vunpack.c.l.b16 %v141
  %v864 = vunpack.c.l.b16 %v142
  %v865 = vunpack.c.h.b16 %v142
  %v866 = vunpack.c.l.b16 %v143
  %v867 = vunpack.c.l.b16 %v144
  %v868 = vunpack.c.h.b16 %v144
  %v869 = vunpack.c.l.b16 %v145
  %v870 = vunpack.c.l.b16 %v146
  %v871 = vunpack.c.h.b16 %v146
  %v872 = vunpack.c.l.b16 %v147
  %v873 = vunpack.c.l.b16 %v148
  %v874 = vunpack.c.h.b16 %v148
  %v875 = vunpack.c.l.b16 %v149
  %v876 = vunpack.c.l.b16 %v150
  %v877 = vunpack.c.h.b16 %v150
  %v878 = vunpack.c.l.b16 %v151
  %v879 = vunpack.c.l.b16 %v152
  %v880 = vunpack.c.h.b16 %v152
  %v881 = vunpack.c.l.b16 %v153
  %v882 = vunpack.c.l.b16 %v154
  %v883 = vunpack.c.h.b16 %v154
  %v884 = vunpack.c.l.b16 %v155
  %v885 = vunpack.c.l.b16 %v156
  %v886 = vunpack.c.h.b16 %v156
  %v887 = vunpack.c.l.b16 %v157
  %v888 = vunpack.c.l.b16 %v158
  %v889 = vunpack.c.h.b16 %v158
  %v890 = vunpack.c.l.b16 %v159
  %v891 = vunpack.c.l.b16 %v160
  %v892 = vunpack.c.h.b16 %v160
  %v893 = vunpack.c.l.b16 %v161
  %v894 = vunpack.c.l.b16 %v162
  %v895 = vunpack.c.h.b16 %v162
  %v896 = vunpack.c.l.b16 %v163
  %v897 = vunpack.c.l.b16 %v164
  %v898 = vunpack.c.h.b16 %v164
  %v899 = vunpack.c.l.b16 %v165
  %v900 = vunpack.c.l.b16 %v166
  %v901 = vunpack.c.h.b16 %v166
  %v902 = vunpack.c.l.b16 %v167
  %v903 = vunpack.c.l.b16 %v168
  %v904 = vunpack.c.h.b16 %v168
  %v905 = vunpack.c.l.b16 %v169
  %v906 = vunpack.c.l.b16 %v170
  %v907 = vunpack.c.h.b16 %v170
  %v908 = vunpack.c.l.b16 %v171
  %v909 = vunpack.c.l.b16 %v172
  %v910 = vunpack.c.h.b16 %v172
  %v911 = vunpack.c.l.b16 %v173
  %v912 = vunpack.c.l.b16 %v174
  %v913 = vunpack.c.h.b16 %v174
  %v914 = vunpack.c.l.b16 %v175
  %v915 = vunpack.c.l.b16 %v176
  %v916 = vunpack.c.h.b16 %v176
  %v917 = vunpack.c.l.b16 %v177
  %v918 = vunpack.c.l.b16 %v178
  %v919 = vunpack.c.h.b16 %v178
  %v920 = vunpack.c.l.b16 %v179
  %v921 = vunpack.c.l.b16 %v180
  %v922 = vunpack.c.h.b16 %v180
  %v923 = vunpack.c.l.b16 %v181
  %v924 = vunpack.c.l.b16 %v182
  %v925 = vunpack.c.h.b16 %v182
  %v926 = vunpack.c.l.b16 %v183
  %v927 = vunpack.c.l.b16 %v184
  %v928 = vunpack.c.h.b16 %v184
  %v929 = vunpack.c.l.b16 %v185
  %v930 = vunpack.c.l.b16 %v186
  %v931 = vunpack.c.h.b16 %v186
  %v932 = vunpack.c.l.b16 %v187
  %v933 = vunpack.c.l.b16 %v188
  %v934 = vunpack.c.h.b16 %v188
  %v935 = vunpack.c.l.b16 %v189
  %v936 = vunpack.c.l.b16 %v190
  %v937 = vunpack.c.h.b16 %v190
  %v938 = vunpack.c.l.b16 %v191
  %v939 = vunpack.c.l.b16 %v192
  %v940 = vunpack.c.h.b16 %v192
  %v941 = vunpack.c.l.b16 %v193
  %v942 = vunpack.c.l.b16 %v194
  %v943 = vunpack.c.h.b16 %v194
  %v944 = vunpack.c.l.b16 %v195
  %v945 = vunpack.c.l.b16 %v196
  %v946 = vunpack.c.h.b16 %v196
  %v947 = vunpack.c.l.b16 %v197
  %v948 = vunpack.c.l.b16 %v198
  %v949 = vunpack.c.h.b16 %v198
  %v950 = vunpack.c.l.b16 %v199
  %v951 = vunpack.c.l.b16 %v200
  %v952 = vunpack.c.h.b16 %v200
  %v953 = vunpack.c.l.b16 %v201
  %v954 = vunpack.c.l.b16 %v202
  %v955 = vunpack.c.h.b16 %v202
  %v956 = vunpack.c.l.b16 %v203
  %v957 = vunpack.c.l.b16 %v204
  %v958 = vunpack.c.h.b16 %v204
  %v959 = vunpack.c.l.b16 %v205
  %v960 = vunpack.c.l.b16 %v206
  %v961 = vunpack.c.h.b16 %v206
  %v962 = vunpack.c.l.b16 %v207
  %v963 = vunpack.c.l.b16 %v208
  %v964 = vunpack.c.h.b16 %v208
  %v965 = vunpack.c.l.b16 %v209
  %v966 = vunpack.c.l.b16 %v210
  %v967 = vunpack.c.h.b16 %v210
  %v968 = vunpack.c.l.b16 %v211
  %v969 = vunpack.c.l.b16 %v212
  %v970 = vunpack.c.h.b16 %v212
  %v971 = vunpack.c.l.b16 %v213
  %v972 = vunpack.c.l.b16 %v214
  %v973 = vunpack.c.h.b16 %v214
  %v974 = vunpack.c.l.b16 %v215
  %v975 = vunpack.c.l.b16 %v216
  %v976 = vunpack.c.h.b16 %v216
  %v977 = vunpack.c.l.b16 %v217
  %v978 = vunpack.c.l.b16 %v218
  %v979 = vunpack.c.h.b16 %v218
  %v980 = vunpack.c.l.b16 %v219
  %v981 = vunpack.c.l.b16 %v220
  %v982 = vunpack.c.h.b16 %v220
  %v983 = vunpack.c.l.b16 %v221
  %v984 = vunpack.c.l.b16 %v222
  %v985 = vunpack.c.h.b16 %v222
  %v986 = vunpack.c.l.b16 %v223
  %v987 = vunpack.c.l.b16 %v224
  %v988 = vunpack.c.h.b16 %v224
  %v989 = vunpack.c.l.b16 %v225
  %v990 = vunpack.c.l.b16 %v226
  %v991 = vunpack.c.h.b16 %v226
  %v992 = vunpack.c.l.b16 %v227
  %v993 = vunpack.c.l.b16 %v228
  %v994 = vunpack.c.h.b16 %v228
  %v995 = vunpack.c.l.b16 %v229
  %v996 = vunpack.c.l.b16 %v230
  %v997 = vunpack.c.h.b16 %v230
  %v998 = vunpack.c.l.b16 %v231
  %v999 = vunpack.c.l.b16 %v232
  %v1000 = vunpack.c.h.b16 %v232
  %v1001 = vunpack.c.l.b16 %v233
  %v1002 = vunpack.c.l.b16 %v234
  %v1003 = vunpack.c.h.b16 %v234
  %v1004 = vunpack.c.l.b16 %v235
  %v1005 = vunpack.c.l.b16 %v236
  %v1006 = vunpack.c.h.b16 %v236
  %v1007 = vunpack.c.l.b16 %v237
  %v1008 = vunpack.c.l.b16 %v238
  %v1009 = vunpack.c.h.b16 %v238
  %v1010 = vunpack.c.l.b16 %v239
  %v1011 = vunpack.c.l.b16 %v240
  %v1012 = vunpack.c.h.b16 %v240
  %v1013 = vunpack.c.l.b16 %v241
  %v1014 = vunpack.c.l.b16 %v242
  %v1015 = vunpack.c.h.b16 %v242
  %v1016 = vunpack.c.l.b16 %v243
  %v1017 = vunpack.c.l.b16 %v244
  %v1018 = vunpack.c.h.b16 %v244
  %v1019 = vunpack.c.l.b16 %v245
  %v1020 = vunpack.c.l.b16 %v246
  %v1021 = vunpack.c.h.b16 %v246
  %v1022 = vunpack.c.l.b16 %v247
  %v1023 = vunpack.c.l.b16 %v248
  %v1024 = vunpack.c.h.b16 %v248
  %v1025 = vunpack.c.l.b16 %v249
  %v1026 = vunpack.c.l.b16 %v250
  %v1027 = vunpack.c.h.b16 %v250
  %v1028 = vunpack.c.l.b16 %v251
  %v1029 = vunpack.c.l.b16 %v252
  %v1030 = vunpack.c.h.b16 %v252
  %v1031 = vunpack.c.l.b16 %v253
  %v1032 = vunpack.c.l.b16 %v254
  %v1033 = vunpack.c.h.b16 %v254
  %v1034 = vunpack.c.l.b16 %v255
  %v1035 = vunpack.c.l.b16 %v256
  %v1036 = vunpack.c.h.b16 %v256
  %v1037 = vunpack.c.l.b16 %v257
  %v1038 = vunpack.c.l.b16 %v258
  %v1039 = vunpack.c.h.b16 %v258
  %v1040 = vunpack.c.l.b16 %v259
  %v1041 = vunpack.c.l.b16 %v260
  %v1042 = vunpack.c.h.b16 %v260
  %v1043 = vunpack.c.l.b16 %v261
  %v1044 = vunpack.c.l.b16 %v262
  %v1045 = vunpack.c.h.b16 %v262
  %v1046 = vunpack.c.l.b16 %v263
  %v1047 = vunpack.c.l.b16 %v264
  %v1048 = vunpack.c.h.b16 %v264
  %v1049 = vunpack.c.l.b16 %v265
  %v1050 = vunpack.c.l.b16 %v266
  %v1051 = vunpack.c.h.b16 %v266
  %v1052 = vunpack.c.l.b16 %v267
  %v1053 = vunpack.c.l.b16 %v268
  %v1054 = vunpack.c.h.b16 %v268
  %v1055 = vunpack.c.l.b16 %v269
  %v1056 = vunpack.c.l.b16 %v270
  %v1057 = vunpack.c.h.b16 %v270
  %v1058 = vunpack.c.l.b16 %v271
  %v1059 = vunpack.c.l.b16 %v272
  %v1060 = vunpack.c.h.b16 %v272
  %v1061 = vunpack.c.l.b16 %v273
  %v1062 = vunpack.c.l.b16 %v274
  %v1063 = vunpack.c.h.b16 %v274
  %v1064 = vunpack.c.l.b16 %v275
  %v1065 = vunpack.c.l.b16 %v276
  %v1066 = vunpack.c.h.b16 %v276
  %v1067 = vunpack.c.l.b16 %v277
  %v1068 = vunpack.c.l.b16 %v278
  %v1069 = vunpack.c.h.b16 %v278
  %v1070 = vunpack.c.l.b16 %v279
  %v1071 = vunpack.c.l.b16 %v280
  %v1072 = vunpack.c.h.b16 %v280
  %v1073 = vunpack.c.l.b16 %v281
  %v1074 = vunpack.c.l.b16 %v282
  %v1075 = vunpack.c.h.b16 %v282
  %v1076 = vunpack.c.l.b16 %v283
  %v1077 = vunpack.c.l.b16 %v284
  %v1078 = vunpack.c.h.b16 %v284
  %v1079 = vunpack.c.l.b16 %v285
  %v1080 = vunpack.c.l.b16 %v286
  %v1081 = vunpack.c.h.b16 %v286
  %v1082 = vunpack.c.l.b16 %v287
  %v1083 = vunpack.c.l.b16 %v288
  %v1084 = vunpack.c.h.b16 %v288
  %v1085 = vunpack.c.l.b16 %v289
  %v1086 = vunpack.c.l.b16 %v290
  %v1087 = vunpack.c.h.b16 %v290
  %v1088 = vunpack.c.l.b16 %v291
  %v1089 = vunpack.c.l.b16 %v292
  %v1090 = vunpack.c.h.b16 %v292
  %v1091 = vunpack.c.l.b16 %v293
  %v1092 = vunpack.c.l.b16 %v294
  %v1093 = vunpack.c.h.b16 %v294
  %v1094 = vunpack.c.l.b16 %v295
  %v1095 = vunpack.c.l.b16 %v296
  %v1096 = vunpack.c.h.b16 %v296
  %v1097 = vunpack.c.l.b16 %v297
  %v1098 = vunpack.c.l.b16 %v298
  %v1099 = vunpack.c.h.b16 %v298
  %v1100 = vunpack.c.l.b16 %v299
  %v1101 = vunpack.c.l.b16 %v300
  %v1102 = vunpack.c.h.b16 %v300
  %v1103 = vunpack.c.l.b16 %v301
  %v1104 = vunpack.c.l.b16 %v302
  %v1105 = vunpack.c.h.b16 %v302
  %v1106 = vunpack.c.l.b16 %v303
  %v1107 = vunpack.c.l.b16 %v304
  %v1108 = vunpack.c.h.b16 %v304
  %v1109 = vunpack.c.l.b16 %v305
  %v1110 = vunpack.c.l.b16 %v306
  %v1111 = vunpack.c.h.b16 %v306
  %v1112 = vunpack.c.l.b16 %v307
  %v1113 = vunpack.c.l.b16 %v308
  %v1114 = vunpack.c.h.b16 %v308
  %v1115 = vunpack.c.l.b16 %v309
  %v1116 = vunpack.c.l.b16 %v310
  %v1117 = vunpack.c.h.b16 %v310
  %v1118 = vunpack.c.l.b16 %v311
  %v1119 = vunpack.c.l.b16 %v312
  %v1120 = vunpack.c.h.b16 %v312
  %v1121 = vunpack.c.l.b16 %v313
  %v1122 = vunpack.c.l.b16 %v314
  %v1123 = vunpack.c.h.b16 %v314
  %v1124 = vunpack.c.l.b16 %v315
  %v1125 = vunpack.c.l.b16 %v316
  %v1126 = vunpack.c.h.b16 %v316
  %v1127 = vunpack.c.l.b16 %v317
  %v1128 = vunpack.c.l.b16 %v318
  %v1129 = vunpack.c.h.b16 %v318
  %v1130 = vunpack.c.l.b16 %v319
  %v1131 = vunpack.c.l.b16 %v320
  %v1132 = vunpack.c.h.b16 %v320
  %v1133 = vunpack.c.l.b16 %v321
  %v1134 = vpack.c.b16 %v705, %v702
  %v1135 = vpack.c.b16 %v706, %v703
  %v1136 = vpack.c.b16 %v707, %v704
  %v1137 = vpack.c.b16 %v711, %v708
  %v1138 = vpack.c.b16 %v712, %v709
  %v1139 = vpack.c.b16 %v713, %v710
  %v1140 = vpack.c.b16 %v717, %v714
  %v1141 = vpack.c.b16 %v718, %v715
  %v1142 = vpack.c.b16 %v719, %v716
  %v1143 = vpack.c.b16 %v723, %v720
  %v1144 = vpack.c.b16 %v724, %v721
  %v1145 = vpack.c.b16 %v725, %v722
  %v1146 = vpack.c.b16 %v729, %v726
  %v1147 = vpack.c.b16 %v730, %v727
  %v1148 = vpack.c.b16 %v731, %v728
  %v1149 = vpack.c.b16 %v735, %v732
  %v1150 = vpack.c.b16 %v736, %v733
  %v1151 = vpack.c.b16 %v737, %v734
  %v1152 = vpack.c.b16 %v741, %v738
  %v1153 = vpack.c.b16 %v742, %v739
  %v1154 = vpack.c.b16 %v743, %v740
  %v1155 = vpack.c.b16 %v747, %v744
  %v1156 = vpack.c.b16 %v748, %v745
  %v1157 = vpack.c.b16 %v749, %v746
  %v1158 = vpack.c.b16 %v753, %v750
  %v1159 = vpack.c.b16 %v754, %v751
  %v1160 = vpack.c.b16 %v755, %v752
  %v1161 = vpack.c.b16 %v759, %v756
  %v1162 = vpack.c.b16 %v760, %v757
  %v1163 = vpack.c.b16 %v761, %v758
  %v1164 = vpack.c.b16 %v765, %v762
  %v1165 = vpack.c.b16 %v766, %v763
  %v1166 = vpack.c.b16 %v767, %v764
  %v1167 = vpack.c.b16 %v771, %v768
  %v1168 = vpack.c.b16 %v772, %v769
  %v1169 = vpack.c.b16 %v773, %v770
  %v1170 = vpack.c.b16 %v777, %v774
  %v1171 = vpack.c.b16 %v778, %v775
  %v1172 = vpack.c.b16 %v779, %v776
  %v1173 = vpack.c.b16 %v783, %v780
  %v1174 = vpack.c.b16 %v784, %v781
  %v1175 = vpack.c.b16 %v785, %v782
  %v1176 = vpack.c.b16 %v789, %v786
  %v1177 = vpack.c.b16 %v790, %v787
  %v1178 = vpack.c.b16 %v791, %v788
  %v1179 = vpack.c.b16 %v795, %v792
  %v1180 = vpack.c.b16 %v796, %v793
  %v1181 = vpack.c.b16 %v797, %v794
  %v1182 = vpack.c.b16 %v801, %v798
  %v1183 = vpack.c.b16 %v802, %v799
  %v1184 = vpack.c.b16 %v803, %v800
  %v1185 = vpack.c.b16 %v807, %v804
  %v1186 = vpack.c.b16 %v808, %v805
  %v1187 = vpack.c.b16 %v809, %v806
  %v1188 = vpack.c.b16 %v813, %v810
  %v1189 = vpack.c.b16 %v814, %v811
  %v1190 = vpack.c.b16 %v815, %v812
  %v1191 = vpack.c.b16 %v819, %v816
  %v1192 = vpack.c.b16 %v820, %v817
  %v1193 = vpack.c.b16 %v821, %v818
  %v1194 = vpack.c.b16 %v825, %v822
  %v1195 = vpack.c.b16 %v826, %v823
  %v1196 = vpack.c.b16 %v827, %v824
  %v1197 = vpack.c.b16 %v831, %v828
  %v1198 = vpack.c.b16 %v832, %v829
  %v1199 = vpack.c.b16 %v833, %v830
  %v1200 = vpack.c.b16 %v837, %v834
  %v1201 = vpack.c.b16 %v838, %v835
  %v1202 = vpack.c.b16 %v839, %v836
  %v1203 = vpack.c.b16 %v843, %v840
  %v1204 = vpack.c.b16 %v844, %v841
  %v1205 = vpack.c.b16 %v845, %v842
  %v1206 = vpack.c.b16 %v849, %v846
  %v1207 = vpack.c.b16 %v850, %v847
  %v1208 = vpack.c.b16 %v851, %v848
  %v1209 = vpack.c.b16 %v855, %v852
  %v1210 = vpack.c.b16 %v856, %v853
  %v1211 = vpack.c.b16 %v857, %v854
  %v1212 = vpack.c.b16 %v861, %v858
  %v1213 = vpack.c.b16 %v862, %v859
  %v1214 = vpack.c.b16 %v863, %v860
  %v1215 = vpack.c.b16 %v867, %v864
  %v1216 = vpack.c.b16 %v868, %v865
  %v1217 = vpack.c.b16 %v869, %v866
  %v1218 = vpack.c.b16 %v873, %v870
  %v1219 = vpack.c.b16 %v874, %v871
  %v1220 = vpack.c.b16 %v875, %v872
  %v1221 = vpack.c.b16 %v879, %v876
  %v1222 = vpack.c.b16 %v880, %v877
  %v1223 = vpack.c.b16 %v881, %v878
  %v1224 = vpack.c.b16 %v885, %v882
  %v1225 = vpack.c.b16 %v886, %v883
  %v1226 = vpack.c.b16 %v887, %v884
  %v1227 = vpack.c.b16 %v891, %v888
  %v1228 = vpack.c.b16 %v892, %v889
  %v1229 = vpack.c.b16 %v893, %v890
  %v1230 = vpack.c.b16 %v897, %v894
  %v1231 = vpack.c.b16 %v898, %v895
  %v1232 = vpack.c.b16 %v899, %v896
  %v1233 = vpack.c.b16 %v903, %v900
  %v1234 = vpack.c.b16 %v904, %v901
  %v1235 = vpack.c.b16 %v905, %v902
  %v1236 = vpack.c.b16 %v909, %v906
  %v1237 = vpack.c.b16 %v910, %v907
  %v1238 = vpack.c.b16 %v911, %v908
  %v1239 = vpack.c.b16 %v915, %v912
  %v1240 = vpack.c.b16 %v916, %v913
  %v1241 = vpack.c.b16 %v917, %v914
  %v1242 = vpack.c.b16 %v921, %v918
  %v1243 = vpack.c.b16 %v922, %v919
  %v1244 = vpack.c.b16 %v923, %v920
  %v1245 = vpack.c.b16 %v927, %v924
  %v1246 = vpack.c.b16 %v928, %v925
  %v1247 = vpack.c.b16 %v929, %v926
  %v1248 = vpack.c.b16 %v933, %v930
  %v1249 = vpack.c.b16 %v934, %v931
  %v1250 = vpack.c.b16 %v935, %v932
  %v1251 = vpack.c.b16 %v939, %v936
  %v1252 = vpack.c.b16 %v940, %v937
  %v1253 = vpack.c.b16 %v941, %v938
  %v1254 = vpack.c.b16 %v945, %v942
  %v1255 = vpack.c.b16 %v946, %v943
  %v1256 = vpack.c.b16 %v947, %v944
  %v1257 = vpack.c.b16 %v951, %v948
  %v1258 = vpack.c.b16 %v952, %v949
  %v1259 = vpack.c.b16 %v953, %v950
  %v1260 = vpack.c.b16 %v957, %v954
  %v1261 = vpack.c.b16 %v958, %v955
  %v1262 = vpack.c.b16 %v959, %v956
  %v1263 = vpack.c.b16 %v963, %v960
  %v1264 = vpack.c.b16 %v964, %v961
  %v1265 = vpack.c.b16 %v965, %v962
  %v1266 = vpack.c.b16 %v969, %v966
  %v1267 = vpack.c.b16 %v970, %v967
  %v1268 = vpack.c.b16 %v971, %v968
  %v1269 = vpack.c.b16 %v975, %v972
  %v1270 = vpack.c.b16 %v976, %v973
  %v1271 = vpack.c.b16 %v977, %v974
  %v1272 = vpack.c.b16 %v981, %v978
  %v1273 = vpack.c.b16 %v982, %v979
  %v1274 = vpack.c.b16 %v983, %v980
  %v1275 = vpack.c.b16 %v987, %v984
  %v1276 = vpack.c.b16 %v988, %v985
  %v1277 = vpack.c.b16 %v989, %v986
  %v1278 = vpack.c.b16 %v993, %v990
  %v1279 = vpack.c.b16 %v994, %v991
  %v1280 = vpack.c.b16 %v995, %v992
  %v1281 = vpack.c.b16 %v999, %v996
  %v1282 = vpack.c.b16 %v1000, %v997
  %v1283 = vpack.c.b16 %v1001, %v998
  %v1284 = vpack.c.b16 %v1005, %v1002
  %v1285 = vpack.c.b16 %v1006, %v1003
  %v1286 = vpack.c.b16 %v1007, %v1004
  %v1287 = vpack.c.b16 %v1011, %v1008
  %v1288 = vpack.c.b16 %v1012, %v1009
  %v1289 = vpack.c.b16 %v1013, %v1010
  %v1290 = vpack.c.b16 %v1017, %v1014
  %v1291 = vpack.c.b16 %v1018, %v1015
  %v1292 = vpack.c.b16 %v1019, %v1016
  %v1293 = vpack.c.b16 %v1023, %v1020
  %v1294 = vpack.c.b16 %v1024, %v1021
  %v1295 = vpack.c.b16 %v1025, %v1022
  %v1296 = vpack.c.b16 %v1029, %v1026
  %v1297 = vpack.c.b16 %v1030, %v1027
  %v1298 = vpack.c.b16 %v1031, %v1028
  %v1299 = vpack.c.b16 %v1035, %v1032
  %v1300 = vpack.c.b16 %v1036, %v1033
  %v1301 = vpack.c.b16 %v1037, %v1034
  %v1302 = vpack.c.b16 %v1041, %v1038
  %v1303 = vpack.c.b16 %v1042, %v1039
  %v1304 = vpack.c.b16 %v1043, %v1040
  %v1305 = vpack.c.b16 %v1047, %v1044
  %v1306 = vpack.c.b16 %v1048, %v1045
  %v1307 = vpack.c.b16 %v1049, %v1046
  %v1308 = vpack.c.b16 %v1053, %v1050
  %v1309 = vpack.c.b16 %v1054, %v1051
  %v1310 = vpack.c.b16 %v1055, %v1052
  %v1311 = vpack.c.b16 %v1059, %v1056
  %v1312 = vpack.c.b16 %v1060, %v1057
  %v1313 = vpack.c.b16 %v1061, %v1058
  %v1314 = vpack.c.b16 %v1065, %v1062
  %v1315 = vpack.c.b16 %v1066, %v1063
  %v1316 = vpack.c.b16 %v1067, %v1064
  %v1317 = vpack.c.b16 %v1071, %v1068
  %v1318 = vpack.c.b16 %v1072, %v1069
  %v1319 = vpack.c.b16 %v1073, %v1070
  %v1320 = vpack.c.b16 %v1077, %v1074
  %v1321 = vpack.c.b16 %v1078, %v1075
  %v1322 = vpack.c.b16 %v1079, %v1076
  %v1323 = vpack.c.b16 %v1083, %v1080
  %v1324 = vpack.c.b16 %v1084, %v1081
  %v1325 = vpack.c.b16 %v1085, %v1082
  %v1326 = vpack.c.b16 %v1089, %v1086
  %v1327 = vpack.c.b16 %v1090, %v1087
  %v1328 = vpack.c.b16 %v1091, %v1088
  %v1329 = vpack.c.b16 %v1095, %v1092
  %v1330 = vpack.c.b16 %v1096, %v1093
  %v1331 = vpack.c.b16 %v1097, %v1094
  %v1332 = vpack.c.b16 %v1101, %v1098
  %v1333 = vpack.c.b16 %v1102, %v1099
  %v1334 = vpack.c.b16 %v1103, %v1100
  %v1335 = vpack.c.b16 %v1107, %v1104
  %v1336 = vpack.c.b16 %v1108, %v1105
  %v1337 = vpack.c.b16 %v1109, %v1106
  %v1338 = vpack.c.b16 %v1113, %v1110
  %v1339 = vpack.c.b16 %v1114, %v1111
  %v1340 = vpack.c.b16 %v1115, %v1112
  %v1341 = vpack.c.b16 %v1119, %v1116
  %v1342 = vpack.c.b16 %v1120, %v1117
  %v1343 = vpack.c.b16 %v1121, %v1118
  %v1344 = vpack.c.b16 %v1125, %v1122
  %v1345 = vpack.c.b16 %v1126, %v1123
  %v1346 = vpack.c.b16 %v1127, %v1124
  %v1347 = vpack.c.b16 %v1131, %v1128
  %v1348 = vpack.c.b16 %v1132, %v1129
  %v1349 = vpack.c.b16 %v1133, %v1130
  %1566 = vmatpush.bf16.msra.mxu0 %v1155
  %1567 = vmatpush.bf16.msra.mxu0 %v1152
  %1568 = vmatpush.bf16.msra.mxu0 %v1149
  %1569 = vmatpush.bf16.msra.mxu0 %v1146
  %1570 = vmatpush.bf16.msra.mxu0 %v1143
  %1571 = vmatpush.bf16.msra.mxu0 %v1140
  %1572 = vmatpush.bf16.msra.mxu0 %v1137
  %1573 = vmatpush.bf16.msra.mxu0 %v1134
  %1574 = vmatmul.bf16.gmra.mxu0 %v378
  %v1575 = vpop.f32.mrf.mxu0
  %v1576 = vadd.f32 0.0, %v1575
  %v1577 = vpop.f32.mrf.mxu0
  %v1578 = vadd.f32 0.0, %v1577
  %1579 = vmatmul.bf16.gmra.mxu0 %v387
  %v1580 = vpop.f32.mrf.mxu0
  %v1581 = vadd.f32 0.0, %v1580
  %v1582 = vpop.f32.mrf.mxu0
  %v1583 = vadd.f32 0.0, %v1582
  %1584 = vdwg.mxu0
  %1585 = vmatpush.bf16.msra.mxu0 %v1179
  %1586 = vmatpush.bf16.msra.mxu0 %v1176
  %1587 = vmatpush.bf16.msra.mxu0 %v1173
  %1588 = vmatpush.bf16.msra.mxu0 %v1170
  %1589 = vmatpush.bf16.msra.mxu0 %v1167
  %1590 = vmatpush.bf16.msra.mxu0 %v1164
  %1591 = vmatpush.bf16.msra.mxu0 %v1161
  %1592 = vmatpush.bf16.msra.mxu0 %v1158
  %1593 = vmatmul.bf16.gmra.mxu0 %v379
  %v1594 = vpop.f32.mrf.mxu0
  %v1595 = vadd.f32 %v1576, %v1594
  %v1596 = vpop.f32.mrf.mxu0
  %v1597 = vadd.f32 %v1578, %v1596
  %1598 = vmatmul.bf16.gmra.mxu0 %v388
  %v1599 = vpop.f32.mrf.mxu0
  %v1600 = vadd.f32 %v1581, %v1599
  %v1601 = vpop.f32.mrf.mxu0
  %v1602 = vadd.f32 %v1583, %v1601
  %1603 = vdwg.mxu0
  %1604 = vmatpush.bf16.msra.mxu0 %v1203
  %1605 = vmatpush.bf16.msra.mxu0 %v1200
  %1606 = vmatpush.bf16.msra.mxu0 %v1197
  %1607 = vmatpush.bf16.msra.mxu0 %v1194
  %1608 = vmatpush.bf16.msra.mxu0 %v1191
  %1609 = vmatpush.bf16.msra.mxu0 %v1188
  %1610 = vmatpush.bf16.msra.mxu0 %v1185
  %1611 = vmatpush.bf16.msra.mxu0 %v1182
  %1612 = vmatmul.bf16.gmra.mxu0 %v380
  %v1613 = vpop.f32.mrf.mxu0
  %v1614 = vadd.f32 %v1595, %v1613
  %v1615 = vpop.f32.mrf.mxu0
  %v1616 = vadd.f32 %v1597, %v1615
  %1617 = vmatmul.bf16.gmra.mxu0 %v389
  %v1618 = vpop.f32.mrf.mxu0
  %v1619 = vadd.f32 %v1600, %v1618
  %v1620 = vpop.f32.mrf.mxu0
  %v1621 = vadd.f32 %v1602, %v1620
  %1622 = vdwg.mxu0
  %1623 = vmatpush.bf16.msra.mxu0 %v1227
  %1624 = vmatpush.bf16.msra.mxu0 %v1224
  %1625 = vmatpush.bf16.msra.mxu0 %v1221
  %1626 = vmatpush.bf16.msra.mxu0 %v1218
  %1627 = vmatpush.bf16.msra.mxu0 %v1215
  %1628 = vmatpush.bf16.msra.mxu0 %v1212
  %1629 = vmatpush.bf16.msra.mxu0 %v1209
  %1630 = vmatpush.bf16.msra.mxu0 %v1206
  %1631 = vmatmul.bf16.gmra.mxu0 %v381
  %v1632 = vpop.f32.mrf.mxu0
  %v1633 = vadd.f32 %v1614, %v1632
  %v1634 = vpop.f32.mrf.mxu0
  %v1635 = vadd.f32 %v1616, %v1634
  %1636 = vmatmul.bf16.gmra.mxu0 %v390
  %v1637 = vpop.f32.mrf.mxu0
  %v1638 = vadd.f32 %v1619, %v1637
  %v1639 = vpop.f32.mrf.mxu0
  %v1640 = vadd.f32 %v1621, %v1639
  %1641 = vdwg.mxu0
  %1642 = vmatpush.bf16.msra.mxu0 %v1251
  %1643 = vmatpush.bf16.msra.mxu0 %v1248
  %1644 = vmatpush.bf16.msra.mxu0 %v1245
  %1645 = vmatpush.bf16.msra.mxu0 %v1242
  %1646 = vmatpush.bf16.msra.mxu0 %v1239
  %1647 = vmatpush.bf16.msra.mxu0 %v1236
  %1648 = vmatpush.bf16.msra.mxu0 %v1233
  %1649 = vmatpush.bf16.msra.mxu0 %v1230
  %1650 = vmatmul.bf16.gmra.mxu0 %v382
  %v1651 = vpop.f32.mrf.mxu0
  %v1652 = vadd.f32 %v1633, %v1651
  %v1653 = vpop.f32.mrf.mxu0
  %v1654 = vadd.f32 %v1635, %v1653
  %1655 = vmatmul.bf16.gmra.mxu0 %v391
  %v1656 = vpop.f32.mrf.mxu0
  %v1657 = vadd.f32 %v1638, %v1656
  %v1658 = vpop.f32.mrf.mxu0
  %v1659 = vadd.f32 %v1640, %v1658
  %1660 = vdwg.mxu0
  %1661 = vmatpush.bf16.msra.mxu0 %v1275
  %1662 = vmatpush.bf16.msra.mxu0 %v1272
  %1663 = vmatpush.bf16.msra.mxu0 %v1269
  %1664 = vmatpush.bf16.msra.mxu0 %v1266
  %1665 = vmatpush.bf16.msra.mxu0 %v1263
  %1666 = vmatpush.bf16.msra.mxu0 %v1260
  %1667 = vmatpush.bf16.msra.mxu0 %v1257
  %1668 = vmatpush.bf16.msra.mxu0 %v1254
  %1669 = vmatmul.bf16.gmra.mxu0 %v383
  %v1670 = vpop.f32.mrf.mxu0
  %v1671 = vadd.f32 %v1652, %v1670
  %v1672 = vpop.f32.mrf.mxu0
  %v1673 = vadd.f32 %v1654, %v1672
  %1674 = vmatmul.bf16.gmra.mxu0 %v392
  %v1675 = vpop.f32.mrf.mxu0
  %v1676 = vadd.f32 %v1657, %v1675
  %v1677 = vpop.f32.mrf.mxu0
  %v1678 = vadd.f32 %v1659, %v1677
  %1679 = vdwg.mxu0
  %1680 = vmatpush.bf16.msra.mxu0 %v1299
  %1681 = vmatpush.bf16.msra.mxu0 %v1296
  %1682 = vmatpush.bf16.msra.mxu0 %v1293
  %1683 = vmatpush.bf16.msra.mxu0 %v1290
  %1684 = vmatpush.bf16.msra.mxu0 %v1287
  %1685 = vmatpush.bf16.msra.mxu0 %v1284
  %1686 = vmatpush.bf16.msra.mxu0 %v1281
  %1687 = vmatpush.bf16.msra.mxu0 %v1278
  %1688 = vmatmul.bf16.gmra.mxu0 %v384
  %v1689 = vpop.f32.mrf.mxu0
  %v1690 = vadd.f32 %v1671, %v1689
  %v1691 = vpop.f32.mrf.mxu0
  %v1692 = vadd.f32 %v1673, %v1691
  %1693 = vmatmul.bf16.gmra.mxu0 %v393
  %v1694 = vpop.f32.mrf.mxu0
  %v1695 = vadd.f32 %v1676, %v1694
  %v1696 = vpop.f32.mrf.mxu0
  %v1697 = vadd.f32 %v1678, %v1696
  %1698 = vdwg.mxu0
  %1699 = vmatpush.bf16.msra.mxu0 %v1323
  %1700 = vmatpush.bf16.msra.mxu0 %v1320
  %1701 = vmatpush.bf16.msra.mxu0 %v1317
  %1702 = vmatpush.bf16.msra.mxu0 %v1314
  %1703 = vmatpush.bf16.msra.mxu0 %v1311
  %1704 = vmatpush.bf16.msra.mxu0 %v1308
  %1705 = vmatpush.bf16.msra.mxu0 %v1305
  %1706 = vmatpush.bf16.msra.mxu0 %v1302
  %1707 = vmatmul.bf16.gmra.mxu0 %v385
  %v1708 = vpop.f32.mrf.mxu0
  %v1709 = vadd.f32 %v1690, %v1708
  %v1710 = vpop.f32.mrf.mxu0
  %v1711 = vadd.f32 %v1692, %v1710
  %1712 = vmatmul.bf16.gmra.mxu0 %v394
  %v1713 = vpop.f32.mrf.mxu0
  %v1714 = vadd.f32 %v1695, %v1713
  %v1715 = vpop.f32.mrf.mxu0
  %v1716 = vadd.f32 %v1697, %v1715
  %1717 = vdwg.mxu0
  %1718 = vmatpush.bf16.msra.mxu0 %v1347
  %1719 = vmatpush.bf16.msra.mxu0 %v1344
  %1720 = vmatpush.bf16.msra.mxu0 %v1341
  %1721 = vmatpush.bf16.msra.mxu0 %v1338
  %1722 = vmatpush.bf16.msra.mxu0 %v1335
  %1723 = vmatpush.bf16.msra.mxu0 %v1332
  %1724 = vmatpush.bf16.msra.mxu0 %v1329
  %1725 = vmatpush.bf16.msra.mxu0 %v1326
  %1726 = vmatmul.bf16.gmra.mxu0 %v386
  %v1727 = vpop.f32.mrf.mxu0
  %v1728 = vadd.f32 %v1709, %v1727
  %v1729 = vpop.f32.mrf.mxu0
  %v1730 = vadd.f32 %v1711, %v1729
  %1731 = vmatmul.bf16.gmra.mxu0 %v395
  %v1732 = vpop.f32.mrf.mxu0
  %v1733 = vadd.f32 %v1714, %v1732
  %v1734 = vpop.f32.mrf.mxu0
  %v1735 = vadd.f32 %v1716, %v1734
  %1736 = vdwg.mxu0
  %1737 = vmatpush.bf16.msra.mxu0 %v1156
  %1738 = vmatpush.bf16.msra.mxu0 %v1153
  %1739 = vmatpush.bf16.msra.mxu0 %v1150
  %1740 = vmatpush.bf16.msra.mxu0 %v1147
  %1741 = vmatpush.bf16.msra.mxu0 %v1144
  %1742 = vmatpush.bf16.msra.mxu0 %v1141
  %1743 = vmatpush.bf16.msra.mxu0 %v1138
  %1744 = vmatpush.bf16.msra.mxu0 %v1135
  %1745 = vmatmul.bf16.gmra.mxu0 %v378
  %v1746 = vpop.f32.mrf.mxu0
  %v1747 = vadd.f32 0.0, %v1746
  %v1748 = vpop.f32.mrf.mxu0
  %v1749 = vadd.f32 0.0, %v1748
  %1750 = vmatmul.bf16.gmra.mxu0 %v387
  %v1751 = vpop.f32.mrf.mxu0
  %v1752 = vadd.f32 0.0, %v1751
  %v1753 = vpop.f32.mrf.mxu0
  %v1754 = vadd.f32 0.0, %v1753
  %1755 = vdwg.mxu0
  %1756 = vmatpush.bf16.msra.mxu0 %v1180
  %1757 = vmatpush.bf16.msra.mxu0 %v1177
  %1758 = vmatpush.bf16.msra.mxu0 %v1174
  %1759 = vmatpush.bf16.msra.mxu0 %v1171
  %1760 = vmatpush.bf16.msra.mxu0 %v1168
  %1761 = vmatpush.bf16.msra.mxu0 %v1165
  %1762 = vmatpush.bf16.msra.mxu0 %v1162
  %1763 = vmatpush.bf16.msra.mxu0 %v1159
  %1764 = vmatmul.bf16.gmra.mxu0 %v379
  %v1765 = vpop.f32.mrf.mxu0
  %v1766 = vadd.f32 %v1747, %v1765
  %v1767 = vpop.f32.mrf.mxu0
  %v1768 = vadd.f32 %v1749, %v1767
  %1769 = vmatmul.bf16.gmra.mxu0 %v388
  %v1770 = vpop.f32.mrf.mxu0
  %v1771 = vadd.f32 %v1752, %v1770
  %v1772 = vpop.f32.mrf.mxu0
  %v1773 = vadd.f32 %v1754, %v1772
  %1774 = vdwg.mxu0
  %1775 = vmatpush.bf16.msra.mxu0 %v1204
  %1776 = vmatpush.bf16.msra.mxu0 %v1201
  %1777 = vmatpush.bf16.msra.mxu0 %v1198
  %1778 = vmatpush.bf16.msra.mxu0 %v1195
  %1779 = vmatpush.bf16.msra.mxu0 %v1192
  %1780 = vmatpush.bf16.msra.mxu0 %v1189
  %1781 = vmatpush.bf16.msra.mxu0 %v1186
  %1782 = vmatpush.bf16.msra.mxu0 %v1183
  %1783 = vmatmul.bf16.gmra.mxu0 %v380
  %v1784 = vpop.f32.mrf.mxu0
  %v1785 = vadd.f32 %v1766, %v1784
  %v1786 = vpop.f32.mrf.mxu0
  %v1787 = vadd.f32 %v1768, %v1786
  %1788 = vmatmul.bf16.gmra.mxu0 %v389
  %v1789 = vpop.f32.mrf.mxu0
  %v1790 = vadd.f32 %v1771, %v1789
  %v1791 = vpop.f32.mrf.mxu0
  %v1792 = vadd.f32 %v1773, %v1791
  %1793 = vdwg.mxu0
  %1794 = vmatpush.bf16.msra.mxu0 %v1228
  %1795 = vmatpush.bf16.msra.mxu0 %v1225
  %1796 = vmatpush.bf16.msra.mxu0 %v1222
  %1797 = vmatpush.bf16.msra.mxu0 %v1219
  %1798 = vmatpush.bf16.msra.mxu0 %v1216
  %1799 = vmatpush.bf16.msra.mxu0 %v1213
  %1800 = vmatpush.bf16.msra.mxu0 %v1210
  %1801 = vmatpush.bf16.msra.mxu0 %v1207
  %1802 = vmatmul.bf16.gmra.mxu0 %v381
  %v1803 = vpop.f32.mrf.mxu0
  %v1804 = vadd.f32 %v1785, %v1803
  %v1805 = vpop.f32.mrf.mxu0
  %v1806 = vadd.f32 %v1787, %v1805
  %1807 = vmatmul.bf16.gmra.mxu0 %v390
  %v1808 = vpop.f32.mrf.mxu0
  %v1809 = vadd.f32 %v1790, %v1808
  %v1810 = vpop.f32.mrf.mxu0
  %v1811 = vadd.f32 %v1792, %v1810
  %1812 = vdwg.mxu0
  %1813 = vmatpush.bf16.msra.mxu0 %v1252
  %1814 = vmatpush.bf16.msra.mxu0 %v1249
  %1815 = vmatpush.bf16.msra.mxu0 %v1246
  %1816 = vmatpush.bf16.msra.mxu0 %v1243
  %1817 = vmatpush.bf16.msra.mxu0 %v1240
  %1818 = vmatpush.bf16.msra.mxu0 %v1237
  %1819 = vmatpush.bf16.msra.mxu0 %v1234
  %1820 = vmatpush.bf16.msra.mxu0 %v1231
  %1821 = vmatmul.bf16.gmra.mxu0 %v382
  %v1822 = vpop.f32.mrf.mxu0
  %v1823 = vadd.f32 %v1804, %v1822
  %v1824 = vpop.f32.mrf.mxu0
  %v1825 = vadd.f32 %v1806, %v1824
  %1826 = vmatmul.bf16.gmra.mxu0 %v391
  %v1827 = vpop.f32.mrf.mxu0
  %v1828 = vadd.f32 %v1809, %v1827
  %v1829 = vpop.f32.mrf.mxu0
  %v1830 = vadd.f32 %v1811, %v1829
  %1831 = vdwg.mxu0
  %1832 = vmatpush.bf16.msra.mxu0 %v1276
  %1833 = vmatpush.bf16.msra.mxu0 %v1273
  %1834 = vmatpush.bf16.msra.mxu0 %v1270
  %1835 = vmatpush.bf16.msra.mxu0 %v1267
  %1836 = vmatpush.bf16.msra.mxu0 %v1264
  %1837 = vmatpush.bf16.msra.mxu0 %v1261
  %1838 = vmatpush.bf16.msra.mxu0 %v1258
  %1839 = vmatpush.bf16.msra.mxu0 %v1255
  %1840 = vmatmul.bf16.gmra.mxu0 %v383
  %v1841 = vpop.f32.mrf.mxu0
  %v1842 = vadd.f32 %v1823, %v1841
  %v1843 = vpop.f32.mrf.mxu0
  %v1844 = vadd.f32 %v1825, %v1843
  %1845 = vmatmul.bf16.gmra.mxu0 %v392
  %v1846 = vpop.f32.mrf.mxu0
  %v1847 = vadd.f32 %v1828, %v1846
  %v1848 = vpop.f32.mrf.mxu0
  %v1849 = vadd.f32 %v1830, %v1848
  %1850 = vdwg.mxu0
  %1851 = vmatpush.bf16.msra.mxu0 %v1300
  %1852 = vmatpush.bf16.msra.mxu0 %v1297
  %1853 = vmatpush.bf16.msra.mxu0 %v1294
  %1854 = vmatpush.bf16.msra.mxu0 %v1291
  %1855 = vmatpush.bf16.msra.mxu0 %v1288
  %1856 = vmatpush.bf16.msra.mxu0 %v1285
  %1857 = vmatpush.bf16.msra.mxu0 %v1282
  %1858 = vmatpush.bf16.msra.mxu0 %v1279
  %1859 = vmatmul.bf16.gmra.mxu0 %v384
  %v1860 = vpop.f32.mrf.mxu0
  %v1861 = vadd.f32 %v1842, %v1860
  %v1862 = vpop.f32.mrf.mxu0
  %v1863 = vadd.f32 %v1844, %v1862
  %1864 = vmatmul.bf16.gmra.mxu0 %v393
  %v1865 = vpop.f32.mrf.mxu0
  %v1866 = vadd.f32 %v1847, %v1865
  %v1867 = vpop.f32.mrf.mxu0
  %v1868 = vadd.f32 %v1849, %v1867
  %1869 = vdwg.mxu0
  %1870 = vmatpush.bf16.msra.mxu0 %v1324
  %1871 = vmatpush.bf16.msra.mxu0 %v1321
  %1872 = vmatpush.bf16.msra.mxu0 %v1318
  %1873 = vmatpush.bf16.msra.mxu0 %v1315
  %1874 = vmatpush.bf16.msra.mxu0 %v1312
  %1875 = vmatpush.bf16.msra.mxu0 %v1309
  %1876 = vmatpush.bf16.msra.mxu0 %v1306
  %1877 = vmatpush.bf16.msra.mxu0 %v1303
  %1878 = vmatmul.bf16.gmra.mxu0 %v385
  %v1879 = vpop.f32.mrf.mxu0
  %v1880 = vadd.f32 %v1861, %v1879
  %v1881 = vpop.f32.mrf.mxu0
  %v1882 = vadd.f32 %v1863, %v1881
  %1883 = vmatmul.bf16.gmra.mxu0 %v394
  %v1884 = vpop.f32.mrf.mxu0
  %v1885 = vadd.f32 %v1866, %v1884
  %v1886 = vpop.f32.mrf.mxu0
  %v1887 = vadd.f32 %v1868, %v1886
  %1888 = vdwg.mxu0
  %1889 = vmatpush.bf16.msra.mxu0 %v1348
  %1890 = vmatpush.bf16.msra.mxu0 %v1345
  %1891 = vmatpush.bf16.msra.mxu0 %v1342
  %1892 = vmatpush.bf16.msra.mxu0 %v1339
  %1893 = vmatpush.bf16.msra.mxu0 %v1336
  %1894 = vmatpush.bf16.msra.mxu0 %v1333
  %1895 = vmatpush.bf16.msra.mxu0 %v1330
  %1896 = vmatpush.bf16.msra.mxu0 %v1327
  %1897 = vmatmul.bf16.gmra.mxu0 %v386
  %v1898 = vpop.f32.mrf.mxu0
  %v1899 = vadd.f32 %v1880, %v1898
  %v1900 = vpop.f32.mrf.mxu0
  %v1901 = vadd.f32 %v1882, %v1900
  %1902 = vmatmul.bf16.gmra.mxu0 %v395
  %v1903 = vpop.f32.mrf.mxu0
  %v1904 = vadd.f32 %v1885, %v1903
  %v1905 = vpop.f32.mrf.mxu0
  %v1906 = vadd.f32 %v1887, %v1905
  %1907 = vdwg.mxu0
  %1908 = vmatpush.bf16.msra.mxu0 %v1157
  %1909 = vmatpush.bf16.msra.mxu0 %v1154
  %1910 = vmatpush.bf16.msra.mxu0 %v1151
  %1911 = vmatpush.bf16.msra.mxu0 %v1148
  %1912 = vmatpush.bf16.msra.mxu0 %v1145
  %1913 = vmatpush.bf16.msra.mxu0 %v1142
  %1914 = vmatpush.bf16.msra.mxu0 %v1139
  %1915 = vmatpush.bf16.msra.mxu0 %v1136
  %1916 = vmatmul.bf16.gmra.mxu0 %v378
  %v1917 = vpop.f32.mrf.mxu0
  %v1918 = vadd.f32 0.0, %v1917
  %v1919 = vpop.f32.mrf.mxu0
  %v1920 = vadd.f32 0.0, %v1919
  %1921 = vmatmul.bf16.gmra.mxu0 %v387
  %v1922 = vpop.f32.mrf.mxu0
  %v1923 = vadd.f32 0.0, %v1922
  %v1924 = vpop.f32.mrf.mxu0
  %v1925 = vadd.f32 0.0, %v1924
  %1926 = vdwg.mxu0
  %1927 = vmatpush.bf16.msra.mxu0 %v1181
  %1928 = vmatpush.bf16.msra.mxu0 %v1178
  %1929 = vmatpush.bf16.msra.mxu0 %v1175
  %1930 = vmatpush.bf16.msra.mxu0 %v1172
  %1931 = vmatpush.bf16.msra.mxu0 %v1169
  %1932 = vmatpush.bf16.msra.mxu0 %v1166
  %1933 = vmatpush.bf16.msra.mxu0 %v1163
  %1934 = vmatpush.bf16.msra.mxu0 %v1160
  %1935 = vmatmul.bf16.gmra.mxu0 %v379
  %v1936 = vpop.f32.mrf.mxu0
  %v1937 = vadd.f32 %v1918, %v1936
  %v1938 = vpop.f32.mrf.mxu0
  %v1939 = vadd.f32 %v1920, %v1938
  %1940 = vmatmul.bf16.gmra.mxu0 %v388
  %v1941 = vpop.f32.mrf.mxu0
  %v1942 = vadd.f32 %v1923, %v1941
  %v1943 = vpop.f32.mrf.mxu0
  %v1944 = vadd.f32 %v1925, %v1943
  %1945 = vdwg.mxu0
  %1946 = vmatpush.bf16.msra.mxu0 %v1205
  %1947 = vmatpush.bf16.msra.mxu0 %v1202
  %1948 = vmatpush.bf16.msra.mxu0 %v1199
  %1949 = vmatpush.bf16.msra.mxu0 %v1196
  %1950 = vmatpush.bf16.msra.mxu0 %v1193
  %1951 = vmatpush.bf16.msra.mxu0 %v1190
  %1952 = vmatpush.bf16.msra.mxu0 %v1187
  %1953 = vmatpush.bf16.msra.mxu0 %v1184
  %1954 = vmatmul.bf16.gmra.mxu0 %v380
  %v1955 = vpop.f32.mrf.mxu0
  %v1956 = vadd.f32 %v1937, %v1955
  %v1957 = vpop.f32.mrf.mxu0
  %v1958 = vadd.f32 %v1939, %v1957
  %1959 = vmatmul.bf16.gmra.mxu0 %v389
  %v1960 = vpop.f32.mrf.mxu0
  %v1961 = vadd.f32 %v1942, %v1960
  %v1962 = vpop.f32.mrf.mxu0
  %v1963 = vadd.f32 %v1944, %v1962
  %1964 = vdwg.mxu0
  %1965 = vmatpush.bf16.msra.mxu0 %v1229
  %1966 = vmatpush.bf16.msra.mxu0 %v1226
  %1967 = vmatpush.bf16.msra.mxu0 %v1223
  %1968 = vmatpush.bf16.msra.mxu0 %v1220
  %1969 = vmatpush.bf16.msra.mxu0 %v1217
  %1970 = vmatpush.bf16.msra.mxu0 %v1214
  %1971 = vmatpush.bf16.msra.mxu0 %v1211
  %1972 = vmatpush.bf16.msra.mxu0 %v1208
  %1973 = vmatmul.bf16.gmra.mxu0 %v381
  %v1974 = vpop.f32.mrf.mxu0
  %v1975 = vadd.f32 %v1956, %v1974
  %v1976 = vpop.f32.mrf.mxu0
  %v1977 = vadd.f32 %v1958, %v1976
  %1978 = vmatmul.bf16.gmra.mxu0 %v390
  %v1979 = vpop.f32.mrf.mxu0
  %v1980 = vadd.f32 %v1961, %v1979
  %v1981 = vpop.f32.mrf.mxu0
  %v1982 = vadd.f32 %v1963, %v1981
  %1983 = vdwg.mxu0
  %1984 = vmatpush.bf16.msra.mxu0 %v1253
  %1985 = vmatpush.bf16.msra.mxu0 %v1250
  %1986 = vmatpush.bf16.msra.mxu0 %v1247
  %1987 = vmatpush.bf16.msra.mxu0 %v1244
  %1988 = vmatpush.bf16.msra.mxu0 %v1241
  %1989 = vmatpush.bf16.msra.mxu0 %v1238
  %1990 = vmatpush.bf16.msra.mxu0 %v1235
  %1991 = vmatpush.bf16.msra.mxu0 %v1232
  %1992 = vmatmul.bf16.gmra.mxu0 %v382
  %v1993 = vpop.f32.mrf.mxu0
  %v1994 = vadd.f32 %v1975, %v1993
  %v1995 = vpop.f32.mrf.mxu0
  %v1996 = vadd.f32 %v1977, %v1995
  %1997 = vmatmul.bf16.gmra.mxu0 %v391
  %v1998 = vpop.f32.mrf.mxu0
  %v1999 = vadd.f32 %v1980, %v1998
  %v2000 = vpop.f32.mrf.mxu0
  %v2001 = vadd.f32 %v1982, %v2000
  %2002 = vdwg.mxu0
  %2003 = vmatpush.bf16.msra.mxu0 %v1277
  %2004 = vmatpush.bf16.msra.mxu0 %v1274
  %2005 = vmatpush.bf16.msra.mxu0 %v1271
  %2006 = vmatpush.bf16.msra.mxu0 %v1268
  %2007 = vmatpush.bf16.msra.mxu0 %v1265
  %2008 = vmatpush.bf16.msra.mxu0 %v1262
  %2009 = vmatpush.bf16.msra.mxu0 %v1259
  %2010 = vmatpush.bf16.msra.mxu0 %v1256
  %2011 = vmatmul.bf16.gmra.mxu0 %v383
  %v2012 = vpop.f32.mrf.mxu0
  %v2013 = vadd.f32 %v1994, %v2012
  %v2014 = vpop.f32.mrf.mxu0
  %v2015 = vadd.f32 %v1996, %v2014
  %2016 = vmatmul.bf16.gmra.mxu0 %v392
  %v2017 = vpop.f32.mrf.mxu0
  %v2018 = vadd.f32 %v1999, %v2017
  %v2019 = vpop.f32.mrf.mxu0
  %v2020 = vadd.f32 %v2001, %v2019
  %2021 = vdwg.mxu0
  %2022 = vmatpush.bf16.msra.mxu0 %v1301
  %2023 = vmatpush.bf16.msra.mxu0 %v1298
  %2024 = vmatpush.bf16.msra.mxu0 %v1295
  %2025 = vmatpush.bf16.msra.mxu0 %v1292
  %2026 = vmatpush.bf16.msra.mxu0 %v1289
  %2027 = vmatpush.bf16.msra.mxu0 %v1286
  %2028 = vmatpush.bf16.msra.mxu0 %v1283
  %2029 = vmatpush.bf16.msra.mxu0 %v1280
  %2030 = vmatmul.bf16.gmra.mxu0 %v384
  %v2031 = vpop.f32.mrf.mxu0
  %v2032 = vadd.f32 %v2013, %v2031
  %v2033 = vpop.f32.mrf.mxu0
  %v2034 = vadd.f32 %v2015, %v2033
  %2035 = vmatmul.bf16.gmra.mxu0 %v393
  %v2036 = vpop.f32.mrf.mxu0
  %v2037 = vadd.f32 %v2018, %v2036
  %v2038 = vpop.f32.mrf.mxu0
  %v2039 = vadd.f32 %v2020, %v2038
  %2040 = vdwg.mxu0
  %2041 = vmatpush.bf16.msra.mxu0 %v1325
  %2042 = vmatpush.bf16.msra.mxu0 %v1322
  %2043 = vmatpush.bf16.msra.mxu0 %v1319
  %2044 = vmatpush.bf16.msra.mxu0 %v1316
  %2045 = vmatpush.bf16.msra.mxu0 %v1313
  %2046 = vmatpush.bf16.msra.mxu0 %v1310
  %2047 = vmatpush.bf16.msra.mxu0 %v1307
  %2048 = vmatpush.bf16.msra.mxu0 %v1304
  %2049 = vmatmul.bf16.gmra.mxu0 %v385
  %v2050 = vpop.f32.mrf.mxu0
  %v2051 = vadd.f32 %v2032, %v2050
  %v2052 = vpop.f32.mrf.mxu0
  %v2053 = vadd.f32 %v2034, %v2052
  %2054 = vmatmul.bf16.gmra.mxu0 %v394
  %v2055 = vpop.f32.mrf.mxu0
  %v2056 = vadd.f32 %v2037, %v2055
  %v2057 = vpop.f32.mrf.mxu0
  %v2058 = vadd.f32 %v2039, %v2057
  %2059 = vdwg.mxu0
  %2060 = vmatpush.bf16.msra.mxu0 %v1349
  %2061 = vmatpush.bf16.msra.mxu0 %v1346
  %2062 = vmatpush.bf16.msra.mxu0 %v1343
  %2063 = vmatpush.bf16.msra.mxu0 %v1340
  %2064 = vmatpush.bf16.msra.mxu0 %v1337
  %2065 = vmatpush.bf16.msra.mxu0 %v1334
  %2066 = vmatpush.bf16.msra.mxu0 %v1331
  %2067 = vmatpush.bf16.msra.mxu0 %v1328
  %2068 = vmatmul.bf16.gmra.mxu0 %v386
  %v2069 = vpop.f32.mrf.mxu0
  %v2070 = vadd.f32 %v2051, %v2069
  %v2071 = vpop.f32.mrf.mxu0
  %v2072 = vadd.f32 %v2053, %v2071
  %2073 = vmatmul.bf16.gmra.mxu0 %v395
  %v2074 = vpop.f32.mrf.mxu0
  %v2075 = vadd.f32 %v2056, %v2074
  %v2076 = vpop.f32.mrf.mxu0
  %v2077 = vadd.f32 %v2058, %v2076
  %2078 = vdwg.mxu0
  %v2079 = vld [vmem:[%s2] sm:$0x3f]
  %v2080 = vadd.f32 %v1728, %v1730
  %v2081 = vadd.f32 %v2080, %v1733
  %vm2082 = vcmask 1040384
  %v2083 = vsel %vm2082, %v1735, 0.0
  %v2084 = vadd.f32 %v2081, %v2083
  %v2085 = vrot.slane %v2084, 4
  %v2086 = vadd.f32 %v2084, %v2085
  %v2087 = vrot.slane %v2086, 2
  %v2088 = vadd.f32 %v2086, %v2087
  %v2089 = vrot.slane %v2088, 1
  %v2090 = vadd.f32 %v2088, %v2089
  %v2091 = vadd.f32 %v1899, %v1901
  %v2092 = vadd.f32 %v2091, %v1904
  %v2093 = vsel %vm2082, %v1906, 0.0
  %v2094 = vadd.f32 %v2092, %v2093
  %v2095 = vrot.slane %v2094, 4
  %v2096 = vadd.f32 %v2094, %v2095
  %v2097 = vrot.slane %v2096, 2
  %v2098 = vadd.f32 %v2096, %v2097
  %v2099 = vrot.slane %v2098, 1
  %v2100 = vadd.f32 %v2098, %v2099
  %v2101 = vadd.f32 %v2070, %v2072
  %v2102 = vadd.f32 %v2101, %v2075
  %v2103 = vsel %vm2082, %v2077, 0.0
  %v2104 = vadd.f32 %v2102, %v2103
  %v2105 = vrot.slane %v2104, 4
  %v2106 = vadd.f32 %v2104, %v2105
  %v2107 = vrot.slane %v2106, 2
  %v2108 = vadd.f32 %v2106, %v2107
  %v2109 = vrot.slane %v2108, 1
  %v2110 = vadd.f32 %v2108, %v2109
  %v2111 = vmul.f32 %v2090, 0.04
  %v2112 = vmul.f32 %v2100, 0.04
  %v2113 = vmul.f32 %v2110, 0.04
  %v2114 = vsub.f32 %v1728, %v2111
  %v2115 = vsub.f32 %v1899, %v2112
  %v2116 = vsub.f32 %v2070, %v2113
  %v2117 = vsub.f32 %v1730, %v2111
  %v2118 = vsub.f32 %v1901, %v2112
  %v2119 = vsub.f32 %v2072, %v2113
  %v2120 = vsub.f32 %v1733, %v2111
  %v2121 = vsub.f32 %v1904, %v2112
  %v2122 = vsub.f32 %v2075, %v2113
  %v2123 = vsub.f32 %v1735, %v2111
  %v2124 = vsub.f32 %v1906, %v2112
  %v2125 = vsub.f32 %v2077, %v2113
  %v2126 = vmul.f32 %v2114, %v2114
  %v2127 = vmul.f32 %v2115, %v2115
  %v2128 = vmul.f32 %v2116, %v2116
  %v2129 = vmul.f32 %v2117, %v2117
  %v2130 = vmul.f32 %v2118, %v2118
  %v2131 = vmul.f32 %v2119, %v2119
  %v2132 = vmul.f32 %v2120, %v2120
  %v2133 = vmul.f32 %v2121, %v2121
  %v2134 = vmul.f32 %v2122, %v2122
  %v2135 = vmul.f32 %v2123, %v2123
  %v2136 = vmul.f32 %v2124, %v2124
  %v2137 = vmul.f32 %v2125, %v2125
  %v2138 = vadd.f32 %v2126, %v2129
  %v2139 = vadd.f32 %v2138, %v2132
  %v2140 = vsel %vm2082, %v2135, 0.0
  %v2141 = vadd.f32 %v2139, %v2140
  %v2142 = vrot.slane %v2141, 4
  %v2143 = vadd.f32 %v2141, %v2142
  %v2144 = vrot.slane %v2143, 2
  %v2145 = vadd.f32 %v2143, %v2144
  %v2146 = vrot.slane %v2145, 1
  %v2147 = vadd.f32 %v2145, %v2146
  %v2148 = vadd.f32 %v2127, %v2130
  %v2149 = vadd.f32 %v2148, %v2133
  %v2150 = vsel %vm2082, %v2136, 0.0
  %v2151 = vadd.f32 %v2149, %v2150
  %v2152 = vrot.slane %v2151, 4
  %v2153 = vadd.f32 %v2151, %v2152
  %v2154 = vrot.slane %v2153, 2
  %v2155 = vadd.f32 %v2153, %v2154
  %v2156 = vrot.slane %v2155, 1
  %v2157 = vadd.f32 %v2155, %v2156
  %v2158 = vadd.f32 %v2128, %v2131
  %v2159 = vadd.f32 %v2158, %v2134
  %v2160 = vsel %vm2082, %v2137, 0.0
  %v2161 = vadd.f32 %v2159, %v2160
  %v2162 = vrot.slane %v2161, 4
  %v2163 = vadd.f32 %v2161, %v2162
  %v2164 = vrot.slane %v2163, 2
  %v2165 = vadd.f32 %v2163, %v2164
  %v2166 = vrot.slane %v2165, 1
  %v2167 = vadd.f32 %v2165, %v2166
  %v2168 = vmul.f32 %v2147, 0.04
  %v2169 = vmul.f32 %v2157, 0.04
  %v2170 = vmul.f32 %v2167, 0.04
  %v2171 = vadd.f32 %v2168, 0.001
  %v2172 = vadd.f32 %v2169, 0.001
  %v2173 = vadd.f32 %v2170, 0.001
  %v2174 = vrsqrt.pop %v2171
  %v2175 = vmul.f32 %v2174, %v2171
  %v2176 = vmul.f32 %v2175, %v2174
  %v2177 = vmul.f32 0.5, %v2176
  %v2178 = vsub.f32 1.5, %v2177
  %v2179 = vmul.f32 %v2174, %v2178
  %vm2180 = vweird.f32 %v2171
  %vm2181 = vweird.f32 %v2174
  %vm2182 = vmor %vm2180, %vm2181
  %v2183 = vsel %vm2182, %v2174, %v2179
  %v2184 = vrsqrt.pop %v2172
  %v2185 = vmul.f32 %v2184, %v2172
  %v2186 = vmul.f32 %v2185, %v2184
  %v2187 = vmul.f32 0.5, %v2186
  %v2188 = vsub.f32 1.5, %v2187
  %v2189 = vmul.f32 %v2184, %v2188
  %vm2190 = vweird.f32 %v2172
  %vm2191 = vweird.f32 %v2184
  %vm2192 = vmor %vm2190, %vm2191
  %v2193 = vsel %vm2192, %v2184, %v2189
  %v2194 = vrsqrt.pop %v2173
  %v2195 = vmul.f32 %v2194, %v2173
  %v2196 = vmul.f32 %v2195, %v2194
  %v2197 = vmul.f32 0.5, %v2196
  %v2198 = vsub.f32 1.5, %v2197
  %v2199 = vmul.f32 %v2194, %v2198
  %vm2200 = vweird.f32 %v2173
  %vm2201 = vweird.f32 %v2194
  %vm2202 = vmor %vm2200, %vm2201
  %v2203 = vsel %vm2202, %v2194, %v2199
  %v2205 = vperm.slane %v2079, 0
  %v2206 = vperm.slane %v2079, 2
  %v2207 = vperm.slane %v2079, 4
  %v2211 = vmul.f32 %v2183, %v2205
  %v2212 = vmul.f32 %v2193, %v2206
  %v2213 = vmul.f32 %v2203, %v2207
  %v2214 = vperm.slane %v2211, 0
  %v2215 = vperm.slane %v2212, 0
  %v2216 = vperm.slane %v2213, 0
  %v2217 = vmul.f32 %v2114, %v2214
  %v2218 = vmul.f32 %v2115, %v2215
  %v2219 = vmul.f32 %v2116, %v2216
  %v2220 = vmul.f32 %v2117, %v2214
  %v2221 = vmul.f32 %v2118, %v2215
  %v2222 = vmul.f32 %v2119, %v2216
  %v2223 = vmul.f32 %v2120, %v2214
  %v2224 = vmul.f32 %v2121, %v2215
  %v2225 = vmul.f32 %v2122, %v2216
  %v2226 = vmul.f32 %v2123, %v2214
  %v2227 = vmul.f32 %v2124, %v2215
  %v2228 = vmul.f32 %v2125, %v2216
  %v2229 = vperm.slane %v2079, 1
  %v2230 = vperm.slane %v2079, 3
  %v2231 = vperm.slane %v2079, 5
  %v2235 = vperm.slane %v2229, 1
  %v2236 = vperm.slane %v2230, 1
  %v2237 = vperm.slane %v2231, 1
  %v2238 = vadd.f32 %v2217, %v2235
  %v2239 = vadd.f32 %v2218, %v2236
  %v2240 = vadd.f32 %v2219, %v2237
  %v2241 = vadd.f32 %v2220, %v2235
  %v2242 = vadd.f32 %v2221, %v2236
  %v2243 = vadd.f32 %v2222, %v2237
  %v2244 = vadd.f32 %v2223, %v2235
  %v2245 = vadd.f32 %v2224, %v2236
  %v2246 = vadd.f32 %v2225, %v2237
  %v2247 = vadd.f32 %v2226, %v2235
  %v2248 = vadd.f32 %v2227, %v2236
  %v2249 = vadd.f32 %v2228, %v2237
  %v2250 = vmax.f32 %v2238, 0.0
  %v2251 = vmax.f32 %v2239, 0.0
  %v2252 = vmax.f32 %v2240, 0.0
  %v2253 = vmax.f32 %v2241, 0.0
  %v2254 = vmax.f32 %v2242, 0.0
  %v2255 = vmax.f32 %v2243, 0.0
  %v2256 = vmax.f32 %v2244, 0.0
  %v2257 = vmax.f32 %v2245, 0.0
  %v2258 = vmax.f32 %v2246, 0.0
  %v2259 = vmax.f32 %v2247, 0.0
  %v2260 = vmax.f32 %v2248, 0.0
  %v2261 = vmax.f32 %v2249, 0.0
  %2262 = vst [vmem:[%s3] sm:$0xff] %v2250
  %2263 = vst [vmem:[%s3 + $0x8] sm:$0xff] %v2251
  %2264 = vst [vmem:[%s3 + $0x10] sm:$0xff] %v2252
  %2265 = vst [vmem:[%s3 + $0x18] sm:$0xff] %v2253
  %2266 = vst [vmem:[%s3 + $0x20] sm:$0xff] %v2254
  %2267 = vst [vmem:[%s3 + $0x28] sm:$0xff] %v2255
  %2268 = vst [vmem:[%s3 + $0x30] sm:$0xff] %v2256
  %2269 = vst [vmem:[%s3 + $0x38] sm:$0xff] %v2257
  %2270 = vst [vmem:[%s3 + $0x40] sm:$0xff] %v2258
  %2271 = vst [vmem:[%s3 + $0x48] sm:$0x1] %v2259
  %2272 = vst [vmem:[%s3 + $0x50] sm:$0x1] %v2260
  %2273 = vst [vmem:[%s3 + $0x58] sm:$0x1] %v2261
  // Predicated region
  $region14: #{conv_bn_relu.1} parent=0 // pred_check
    _
  $region15: #{conv_bn_relu.1} parent=0 // pred_check_branch
    %2275 = sbr.rel (0) target = $region17
  $region16: #{conv_bn_relu.1} parent=0 // pred_region
    _
  $region17: #{conv_bn_relu.1} parent=0 // pred_fallthru
    _
  // Predicated region
  $region18: #{conv_bn_relu.1} parent=0 // pred_check
    _
  $region19: #{conv_bn_relu.1} parent=0 // pred_check_branch
    %2277 = sbr.rel (0) target = $region21
  $region20: #{conv_bn_relu.1} parent=0 // pred_region
    _
  $region21: #{conv_bn_relu.1} parent=0 // pred_fallthru
    _

</llo_original>
